<compile_context>
chip_gen: v6e
topology: v6e:2x2x1
jax: 0.10.0
libtpu: 0.0.40
codegen_flags: <defaults>
</compile_context>

<pallas_src>
import math

import jax
import jax.numpy as jnp
from jax.experimental import pallas as pl
from jax.experimental.pallas import tpu as pltpu

NEG_SLOPE = 0.01  # nn.LeakyReLU default negative_slope


# ----------------------------------------------------------------------------
# Pallas kernel: one 3x3x3 conv (+bias, +LeakyReLU, +optional fused residual)
# ----------------------------------------------------------------------------
def _make_conv_kernel(H, lrelu, skip_mode):
    """Grid = (N, D, 3); last axis = depth tap kd (reduction, accumulated in VMEM).

    Refs (in order):
      xpad_ref : (1, 1, H+2, (W+2)*Cin)    padded input, depth slice d+kd
      w_ref    : (1, 3, (W+2)*Cin, W*Cout) banded weight for tap kd
      b_ref    : (1, W*Cout)               bias tiled over W
      [ skip refs: x slab (1,1,H,W*Cs) [, blockdiag skip W, skip bias] ]
      o_ref    : (1, 1, H, W*Cout)
      acc_ref  : (H, W*Cout) f32 scratch
    """

    def kernel(*refs):
        xpad_ref, w_ref, b_ref = refs[:3]
        o_ref, acc_ref = refs[-2:]
        extra = refs[3:-2]
        kd = pl.program_id(2)

        @pl.when(kd == 0)
        def _init():
            acc_ref[...] = jnp.zeros_like(acc_ref)

        xs = xpad_ref[0, 0]                           # (H+2, (W+2)*Cin)
        acc = acc_ref[...]
        for kh in range(3):                           # in-plane row taps
            acc = acc + jnp.dot(xs[kh:kh + H, :], w_ref[0, kh],
                                preferred_element_type=jnp.float32)
        acc_ref[...] = acc

        @pl.when(kd == 2)
        def _finalize():
            r = acc_ref[...] + b_ref[...]
            if lrelu:
                r = jnp.where(r >= 0, r, NEG_SLOPE * r)
            if skip_mode == "conv":                   # fused 1x1x1 skip conv
                xs2_ref, ws_ref, bs_ref = extra
                r = r + jnp.dot(xs2_ref[0, 0], ws_ref[...],
                                preferred_element_type=jnp.float32) + bs_ref[...]
            elif skip_mode == "identity":             # fused identity residual
                r = r + extra[0][0, 0]
            o_ref[0, 0] = r.astype(o_ref.dtype)

    return kernel


# ----------------------------------------------------------------------------
# Weight preparation (tiny, done once in the XLA wrapper)
# ----------------------------------------------------------------------------
def _banded_conv_weight(w, W):
    """PyTorch conv weight (Cout, Cin, 3, 3, 3) -> (3, 3, (W+2)*Cin, W*Cout).

    For each (kd, kh) the matrix is banded over the padded-W axis so that
    (H, (W+2)*Cin) @ mat contracts the 3 in-plane column taps and Cin, and
    emits a lane-dense (H, W*Cout) slab."""
    wt = jnp.transpose(w, (2, 3, 4, 1, 0))            # (kd, kh, kw, Cin, Cout)
    Cin, Cout = wt.shape[3], wt.shape[4]
    wi = jnp.arange(W + 2)[:, None]                   # padded input column
    wo = jnp.arange(W)[None, :]                       # output column
    kw = wi - wo                                      # tap index = wi - wo
    valid = ((kw >= 0) & (kw <= 2)).astype(wt.dtype)
    m = wt[:, :, jnp.clip(kw, 0, 2)]                  # (3,3,W+2,W,Cin,Cout)
    m = m * valid[None, None, :, :, None, None]
    m = jnp.transpose(m, (0, 1, 2, 4, 3, 5))          # (3,3,W+2,Cin,W,Cout)
    return m.reshape(3, 3, (W + 2) * Cin, W * Cout)


def _blockdiag_skip_weight(ws, W):
    """1x1x1 conv weight (Cout, Cin) -> block-diagonal (W*Cin, W*Cout)."""
    wsT = ws.T                                        # (Cin, Cout)
    Cin, Cout = wsT.shape
    eye = jnp.eye(W, dtype=wsT.dtype)
    t = eye[:, None, :, None] * wsT[None, :, None, :]  # (W, Cin, W, Cout)
    return t.reshape(W * Cin, W * Cout)


# ----------------------------------------------------------------------------
# One conv3x3x3 stage as a single tiled, pipelined pallas_call
# ----------------------------------------------------------------------------
def _conv3x3x3(x, w, b, *, lrelu, skip_x=None, skip_w=None, skip_b=None):
    """x: (N, D, H, W, Cin) f32 -> (N, D, H, W, Cout)."""
    N, D, H, W, Cin = x.shape
    Cout = w.shape[0]
    WCp = (W + 2) * Cin
    WCo = W * Cout

    xpad = jnp.pad(x, ((0, 0), (1, 1), (1, 1), (1, 1), (0, 0)))
    xpad = xpad.reshape(N, D + 2, H + 2, WCp)
    wbd = _banded_conv_weight(w.astype(jnp.float32), W)
    brow = jnp.tile(b.astype(jnp.float32), W)[None, :]

    args = [xpad, wbd, brow]
    in_specs = [
        # streamed activation slab: one padded depth slice per grid step
        pl.BlockSpec((1, 1, H + 2, WCp), lambda n, d, kd: (n, d + kd, 0, 0)),
        # banded weight for tap kd (small, pipelined alongside)
        pl.BlockSpec((1, 3, WCp, WCo), lambda n, d, kd: (kd, 0, 0, 0)),
        # bias row: resident (constant index)
        pl.BlockSpec((1, WCo), lambda n, d, kd: (0, 0)),
    ]

    skip_mode = None
    if skip_x is not None:
        Cs = skip_x.shape[-1]
        args.append(skip_x.reshape(N, D, H, W * Cs))
        in_specs.append(
            pl.BlockSpec((1, 1, H, W * Cs), lambda n, d, kd: (n, d, 0, 0)))
        if skip_w is not None:
            skip_mode = "conv"
            args.append(_blockdiag_skip_weight(skip_w.astype(jnp.float32), W))
            args.append(jnp.tile(skip_b.astype(jnp.float32), W)[None, :])
            in_specs.append(
                pl.BlockSpec((W * Cs, WCo), lambda n, d, kd: (0, 0)))
            in_specs.append(pl.BlockSpec((1, WCo), lambda n, d, kd: (0, 0)))
        else:
            skip_mode = "identity"

    out = pl.pallas_call(
        _make_conv_kernel(H, lrelu, skip_mode),
        out_shape=jax.ShapeDtypeStruct((N, D, H, WCo), jnp.float32),
        grid=(N, D, 3),
        in_specs=in_specs,
        out_specs=pl.BlockSpec((1, 1, H, WCo), lambda n, d, kd: (n, d, 0, 0)),
        scratch_shapes=[pltpu.VMEM((H, WCo), jnp.float32)],
        compiler_params=pltpu.CompilerParams(
            dimension_semantics=("parallel", "parallel", "arbitrary"),
            vmem_limit_bytes=32 * 1024 * 1024),
    )(*args)
    return out.reshape(N, D, H, W, Cout)


# ----------------------------------------------------------------------------
# ResidualBlock3D forward (NCDHW in / NCDHW out, like the PyTorch module)
# ----------------------------------------------------------------------------
@jax.jit
def residual_block3d(x_ncdhw, params):
    x = jnp.transpose(x_ncdhw, (0, 2, 3, 4, 1)).astype(jnp.float32)  # NDHWC
    # conv1 + LeakyReLU
    y = _conv3x3x3(x, params["w1"], params["b1"], lrelu=True)
    # conv2 + LeakyReLU + residual (1x1x1 skip conv or identity), fully fused
    out = _conv3x3x3(y, params["w2"], params["b2"], lrelu=True,
                     skip_x=x, skip_w=params.get("w_skip"),
                     skip_b=params.get("b_skip"))
    return jnp.transpose(out, (0, 4, 1, 2, 3))  # back to NCDHW


# ----------------------------------------------------------------------------
# Pure-JAX reference (mirrors the PyTorch forward) for correctness check
# ----------------------------------------------------------------------------
def _leaky(x):
    return jnp.where(x >= 0, x, NEG_SLOPE * x)


def _conv3d_ref(x, w, b):  # x NDHWC, w (O,I,3,3,3), padding=1
    wj = jnp.transpose(w, (2, 3, 4, 1, 0))  # DHWIO
    out = jax.lax.conv_general_dilated(
        x, wj, window_strides=(1, 1, 1), padding=((1, 1), (1, 1), (1, 1)),
        dimension_numbers=("NDHWC", "DHWIO", "NDHWC"))
    return out + b


def residual_block3d_ref(x_ncdhw, params):
    x = jnp.transpose(x_ncdhw, (0, 2, 3, 4, 1)).astype(jnp.float32)
    y = _leaky(_conv3d_ref(x, params["w1"], params["b1"]))
    y = _leaky(_conv3d_ref(y, params["w2"], params["b2"]))
    if params.get("w_skip") is not None:
        idn = jnp.einsum("ndhwi,oi->ndhwo", x, params["w_skip"]) + params["b_skip"]
    else:
        idn = x
    return jnp.transpose(y + idn, (0, 4, 1, 2, 3))


# ----------------------------------------------------------------------------
if __name__ == "__main__":
    N, D, H, W = 2, 8, 8, 16  # small; W*out_ch = 128 -> lane-dense slabs

    def make_params(key, in_ch, out_ch):
        k = jax.random.split(key, 6)
        p = {
            "w1": jax.random.normal(k[0], (out_ch, in_ch, 3, 3, 3), jnp.float32)
                  / math.sqrt(in_ch * 27),
            "b1": 0.1 * jax.random.normal(k[1], (out_ch,), jnp.float32),
            "w2": jax.random.normal(k[2], (out_ch, out_ch, 3, 3, 3), jnp.float32)
                  / math.sqrt(out_ch * 27),
            "b2": 0.1 * jax.random.normal(k[3], (out_ch,), jnp.float32),
            "w_skip": None,
            "b_skip": None,
        }
        if in_ch != out_ch:
            p["w_skip"] = (jax.random.normal(k[4], (out_ch, in_ch), jnp.float32)
                           / math.sqrt(in_ch))
            p["b_skip"] = 0.1 * jax.random.normal(k[5], (out_ch,), jnp.float32)
        return p

    key = jax.random.PRNGKey(0)
    # config 1: in_ch != out_ch (exercises the fused 1x1x1 skip conv)
    # config 2: in_ch == out_ch (exercises the fused identity residual)
    for cfg_i, (in_ch, out_ch) in enumerate([(4, 8), (8, 8)]):
        kp, kx = jax.random.split(jax.random.fold_in(key, cfg_i))
        params = make_params(kp, in_ch, out_ch)
        x = jax.random.normal(kx, (N, in_ch, D, H, W), jnp.float32)

        out = jax.block_until_ready(residual_block3d(x, params))
        assert out.shape == (N, out_ch, D, H, W), out.shape

        ref = jax.block_until_ready(residual_block3d_ref(x, params))
        max_err = float(jnp.max(jnp.abs(out - ref)))
        # default-precision MXU vs XLA conv reference -> allow small slack
        assert max_err < 3e-2, f"config {(in_ch, out_ch)}: max err {max_err}"

    print("KERNEL_OK")
</pallas_src>

<mosaic_0001>
module attributes {stable_mosaic.version = 11 : i64} {
  func.func @kernel(%arg0: i32, %arg1: i32, %arg2: i32, %arg3: memref<1x1x10x72xf32, #tpu.memory_space<vmem>>, %arg4: memref<1x3x72x128xf32, #tpu.memory_space<vmem>>, %arg5: memref<1x128xf32, #tpu.memory_space<vmem>>, %arg6: memref<1x1x8x128xf32, #tpu.memory_space<vmem>>, %arg7: memref<8x128xf32, #tpu.memory_space<vmem>>) attributes {dimension_semantics = [#tpu.dimension_semantics<parallel>, #tpu.dimension_semantics<parallel>, #tpu.dimension_semantics<arbitrary>], iteration_bounds = array<i64: 2, 8, 3>, scalar_prefetch = 0 : i64, scratch_operands = 1 : i64, tpu.core_type = #tpu.core_type<tc>, window_params = [{transform_indices = @transform_0, window_bounds = array<i64: 1, 1, 10, 72>}, {transform_indices = @transform_1, window_bounds = array<i64: 1, 3, 72, 128>}, {pipeline_mode = #tpu.pipeline_mode<synchronous>, transform_indices = @transform_2, window_bounds = array<i64: 1, 128>}, {transform_indices = @transform_3, window_bounds = array<i64: 1, 1, 8, 128>}]} {
    %c0_i32 = arith.constant 0 : i32
    %0 = arith.cmpi eq, %arg2, %c0_i32 : i32
    %1 = arith.extui %0 : i1 to i32
    %c0_i32_0 = arith.constant 0 : i32
    %2 = arith.cmpi ne, %1, %c0_i32_0 : i32
    scf.if %2 {
      %cst_21 = arith.constant 0.000000e+00 : f32
      %25 = vector.broadcast %cst_21 : f32 to vector<8x128xf32>
      %c0_22 = arith.constant 0 : index
      %c0_23 = arith.constant 0 : index
      %26 = vector.load %arg7[%c0_22, %c0_23] : memref<8x128xf32, #tpu.memory_space<vmem>>, vector<8x128xf32>
      tpu.vector_store %arg7[%c0_22, %c0_23], %25 {strides = array<i32>} : memref<8x128xf32, #tpu.memory_space<vmem>>, vector<8x128xf32>,
    } else {
    }
    %c0 = arith.constant 0 : index
    %c0_1 = arith.constant 0 : index
    %c0_2 = arith.constant 0 : index
    %c0_3 = arith.constant 0 : index
    %3 = vector.load %arg3[%c0, %c0_1, %c0_2, %c0_3] : memref<1x1x10x72xf32, #tpu.memory_space<vmem>>, vector<1x1x10x72xf32>
    %4 = vector.shape_cast %3 : vector<1x1x10x72xf32> to vector<10x72xf32>
    %c0_4 = arith.constant 0 : index
    %c0_5 = arith.constant 0 : index
    %5 = vector.load %arg7[%c0_4, %c0_5] : memref<8x128xf32, #tpu.memory_space<vmem>>, vector<8x128xf32>
    %6 = vector.extract_strided_slice %4 {offsets = [0, 0], sizes = [8, 72], strides = [1, 1]} : vector<10x72xf32> to vector<8x72xf32>
    %c0_6 = arith.constant 0 : index
    %c0_7 = arith.constant 0 : index
    %c0_8 = arith.constant 0 : index
    %c0_9 = arith.constant 0 : index
    %7 = vector.load %arg4[%c0_6, %c0_7, %c0_8, %c0_9] : memref<1x3x72x128xf32, #tpu.memory_space<vmem>>, vector<1x1x72x128xf32>
    %8 = vector.shape_cast %7 : vector<1x1x72x128xf32> to vector<72x128xf32>
    %cst = arith.constant dense<0.000000e+00> : vector<8x128xf32>
    %9 = tpu.matmul %6, %8, %cst {dimension_numbers = #tpu.dot_dimension_numbers<[1], [0], [0], [1], [0, 0, 1, 1], [], []>} : vector<8x72xf32>, vector<72x128xf32>, vector<8x128xf32> -> vector<8x128xf32>
    %10 = arith.addf %5, %9 : vector<8x128xf32>
    %11 = vector.extract_strided_slice %4 {offsets = [1, 0], sizes = [8, 72], strides = [1, 1]} : vector<10x72xf32> to vector<8x72xf32>
    %c0_10 = arith.constant 0 : index
    %c1 = arith.constant 1 : index
    %c0_11 = arith.constant 0 : index
    %c0_12 = arith.constant 0 : index
    %12 = vector.load %arg4[%c0_10, %c1, %c0_11, %c0_12] : memref<1x3x72x128xf32, #tpu.memory_space<vmem>>, vector<1x1x72x128xf32>
    %13 = vector.shape_cast %12 : vector<1x1x72x128xf32> to vector<72x128xf32>
    %cst_13 = arith.constant dense<0.000000e+00> : vector<8x128xf32>
    %14 = tpu.matmul %11, %13, %cst_13 {dimension_numbers = #tpu.dot_dimension_numbers<[1], [0], [0], [1], [0, 0, 1, 1], [], []>} : vector<8x72xf32>, vector<72x128xf32>, vector<8x128xf32> -> vector<8x128xf32>
    %15 = arith.addf %10, %14 : vector<8x128xf32>
    %16 = vector.extract_strided_slice %4 {offsets = [2, 0], sizes = [8, 72], strides = [1, 1]} : vector<10x72xf32> to vector<8x72xf32>
    %c0_14 = arith.constant 0 : index
    %c2 = arith.constant 2 : index
    %c0_15 = arith.constant 0 : index
    %c0_16 = arith.constant 0 : index
    %17 = vector.load %arg4[%c0_14, %c2, %c0_15, %c0_16] : memref<1x3x72x128xf32, #tpu.memory_space<vmem>>, vector<1x1x72x128xf32>
    %18 = vector.shape_cast %17 : vector<1x1x72x128xf32> to vector<72x128xf32>
    %cst_17 = arith.constant dense<0.000000e+00> : vector<8x128xf32>
    %19 = tpu.matmul %16, %18, %cst_17 {dimension_numbers = #tpu.dot_dimension_numbers<[1], [0], [0], [1], [0, 0, 1, 1], [], []>} : vector<8x72xf32>, vector<72x128xf32>, vector<8x128xf32> -> vector<8x128xf32>
    %20 = arith.addf %15, %19 : vector<8x128xf32>
    %c0_18 = arith.constant 0 : index
    %c0_19 = arith.constant 0 : index
    %21 = vector.load %arg7[%c0_18, %c0_19] : memref<8x128xf32, #tpu.memory_space<vmem>>, vector<8x128xf32>
    tpu.vector_store %arg7[%c0_18, %c0_19], %20 {strides = array<i32>} : memref<8x128xf32, #tpu.memory_space<vmem>>, vector<8x128xf32>,
    %c2_i32 = arith.constant 2 : i32
    %22 = arith.cmpi eq, %arg2, %c2_i32 : i32
    %23 = arith.extui %22 : i1 to i32
    %c0_i32_20 = arith.constant 0 : i32
    %24 = arith.cmpi ne, %23, %c0_i32_20 : i32
    scf.if %24 {
      %c0_21 = arith.constant 0 : index
      %c0_22 = arith.constant 0 : index
      %25 = vector.load %arg7[%c0_21, %c0_22] : memref<8x128xf32, #tpu.memory_space<vmem>>, vector<8x128xf32>
      %c0_23 = arith.constant 0 : index
      %c0_24 = arith.constant 0 : index
      %26 = vector.load %arg5[%c0_23, %c0_24] : memref<1x128xf32, #tpu.memory_space<vmem>>, vector<1x128xf32>
      %27 = vector.broadcast %26 : vector<1x128xf32> to vector<8x128xf32>
      %28 = arith.addf %25, %27 : vector<8x128xf32>
      %cst_25 = arith.constant 0.000000e+00 : f32
      %29 = vector.broadcast %cst_25 : f32 to vector<8x128xf32>
      %30 = arith.cmpf oge, %28, %29 : vector<8x128xf32>
      %cst_26 = arith.constant 0.00999999977 : f32
      %31 = vector.broadcast %cst_26 : f32 to vector<8x128xf32>
      %32 = arith.mulf %31, %28 : vector<8x128xf32>
      %33 = arith.select %30, %28, %32 : vector<8x128xi1>, vector<8x128xf32>
      %c0_27 = arith.constant 0 : index
      %c0_28 = arith.constant 0 : index
      %c0_29 = arith.constant 0 : index
      %c0_30 = arith.constant 0 : index
      %34 = vector.load %arg6[%c0_27, %c0_28, %c0_29, %c0_30] : memref<1x1x8x128xf32, #tpu.memory_space<vmem>>, vector<1x1x8x128xf32>
      %35 = vector.shape_cast %34 : vector<1x1x8x128xf32> to vector<8x128xf32>
      %36 = vector.shape_cast %33 : vector<8x128xf32> to vector<1x1x8x128xf32>
      tpu.vector_store %arg6[%c0_27, %c0_28, %c0_29, %c0_30], %36 {strides = array<i32>} : memref<1x1x8x128xf32, #tpu.memory_space<vmem>>, vector<1x1x8x128xf32>,
    } else {
    }
    return
  }
  func.func @transform_0(%arg0: i32, %arg1: i32, %arg2: i32) -> (i32, i32, i32, i32) {
    %0 = arith.addi %arg1, %arg2 : i32
    %c0_i32 = arith.constant 0 : i32
    %c0_i32_0 = arith.constant 0 : i32
    %c0_i32_1 = arith.constant 0 : i32
    return %arg0, %0, %c0_i32, %c0_i32_0 : i32, i32, i32, i32
  }
  func.func @transform_1(%arg0: i32, %arg1: i32, %arg2: i32) -> (i32, i32, i32, i32) {
    %c0_i32 = arith.constant 0 : i32
    %c0_i32_0 = arith.constant 0 : i32
    %c0_i32_1 = arith.constant 0 : i32
    %c0_i32_2 = arith.constant 0 : i32
    return %arg2, %c0_i32, %c0_i32_0, %c0_i32_1 : i32, i32, i32, i32
  }
  func.func @transform_2(%arg0: i32, %arg1: i32, %arg2: i32) -> (i32, i32) {
    %c0_i32 = arith.constant 0 : i32
    %c0_i32_0 = arith.constant 0 : i32
    %c0_i32_1 = arith.constant 0 : i32
    return %c0_i32, %c0_i32_0 : i32, i32
  }
  func.func @transform_3(%arg0: i32, %arg1: i32, %arg2: i32) -> (i32, i32, i32, i32) {
    %c0_i32 = arith.constant 0 : i32
    %c0_i32_0 = arith.constant 0 : i32
    %c0_i32_1 = arith.constant 0 : i32
    return %arg0, %arg1, %c0_i32, %c0_i32_0 : i32, i32, i32, i32
  }
}

module attributes {stable_mosaic.version = 11 : i64} {
  func.func @kernel(%arg0: i32, %arg1: i32, %arg2: i32, %arg3: memref<1x1x10x144xf32, #tpu.memory_space<vmem>>, %arg4: memref<1x3x144x128xf32, #tpu.memory_space<vmem>>, %arg5: memref<1x128xf32, #tpu.memory_space<vmem>>, %arg6: memref<1x1x8x64xf32, #tpu.memory_space<vmem>>, %arg7: memref<64x128xf32, #tpu.memory_space<vmem>>, %arg8: memref<1x128xf32, #tpu.memory_space<vmem>>, %arg9: memref<1x1x8x128xf32, #tpu.memory_space<vmem>>, %arg10: memref<8x128xf32, #tpu.memory_space<vmem>>) attributes {dimension_semantics = [#tpu.dimension_semantics<parallel>, #tpu.dimension_semantics<parallel>, #tpu.dimension_semantics<arbitrary>], iteration_bounds = array<i64: 2, 8, 3>, scalar_prefetch = 0 : i64, scratch_operands = 1 : i64, tpu.core_type = #tpu.core_type<tc>, window_params = [{transform_indices = @transform_0, window_bounds = array<i64: 1, 1, 10, 144>}, {transform_indices = @transform_1, window_bounds = array<i64: 1, 3, 144, 128>}, {pipeline_mode = #tpu.pipeline_mode<synchronous>, transform_indices = @transform_2, window_bounds = array<i64: 1, 128>}, {transform_indices = @transform_3, window_bounds = array<i64: 1, 1, 8, 64>}, {pipeline_mode = #tpu.pipeline_mode<synchronous>, transform_indices = @transform_4, window_bounds = array<i64: 64, 128>}, {pipeline_mode = #tpu.pipeline_mode<synchronous>, transform_indices = @transform_5, window_bounds = array<i64: 1, 128>}, {transform_indices = @transform_6, window_bounds = array<i64: 1, 1, 8, 128>}]} {
    %c0_i32 = arith.constant 0 : i32
    %0 = arith.cmpi eq, %arg2, %c0_i32 : i32
    %1 = arith.extui %0 : i1 to i32
    %c0_i32_0 = arith.constant 0 : i32
    %2 = arith.cmpi ne, %1, %c0_i32_0 : i32
    scf.if %2 {
      %cst_21 = arith.constant 0.000000e+00 : f32
      %25 = vector.broadcast %cst_21 : f32 to vector<8x128xf32>
      %c0_22 = arith.constant 0 : index
      %c0_23 = arith.constant 0 : index
      %26 = vector.load %arg10[%c0_22, %c0_23] : memref<8x128xf32, #tpu.memory_space<vmem>>, vector<8x128xf32>
      tpu.vector_store %arg10[%c0_22, %c0_23], %25 {strides = array<i32>} : memref<8x128xf32, #tpu.memory_space<vmem>>, vector<8x128xf32>,
    } else {
    }
    %c0 = arith.constant 0 : index
    %c0_1 = arith.constant 0 : index
    %c0_2 = arith.constant 0 : index
    %c0_3 = arith.constant 0 : index
    %3 = vector.load %arg3[%c0, %c0_1, %c0_2, %c0_3] : memref<1x1x10x144xf32, #tpu.memory_space<vmem>>, vector<1x1x10x144xf32>
    %4 = vector.shape_cast %3 : vector<1x1x10x144xf32> to vector<10x144xf32>
    %c0_4 = arith.constant 0 : index
    %c0_5 = arith.constant 0 : index
    %5 = vector.load %arg10[%c0_4, %c0_5] : memref<8x128xf32, #tpu.memory_space<vmem>>, vector<8x128xf32>
    %6 = vector.extract_strided_slice %4 {offsets = [0, 0], sizes = [8, 144], strides = [1, 1]} : vector<10x144xf32> to vector<8x144xf32>
    %c0_6 = arith.constant 0 : index
    %c0_7 = arith.constant 0 : index
    %c0_8 = arith.constant 0 : index
    %c0_9 = arith.constant 0 : index
    %7 = vector.load %arg4[%c0_6, %c0_7, %c0_8, %c0_9] : memref<1x3x144x128xf32, #tpu.memory_space<vmem>>, vector<1x1x144x128xf32>
    %8 = vector.shape_cast %7 : vector<1x1x144x128xf32> to vector<144x128xf32>
    %cst = arith.constant dense<0.000000e+00> : vector<8x128xf32>
    %9 = tpu.matmul %6, %8, %cst {dimension_numbers = #tpu.dot_dimension_numbers<[1], [0], [0], [1], [0, 0, 1, 1], [], []>} : vector<8x144xf32>, vector<144x128xf32>, vector<8x128xf32> -> vector<8x128xf32>
    %10 = arith.addf %5, %9 : vector<8x128xf32>
    %11 = vector.extract_strided_slice %4 {offsets = [1, 0], sizes = [8, 144], strides = [1, 1]} : vector<10x144xf32> to vector<8x144xf32>
    %c0_10 = arith.constant 0 : index
    %c1 = arith.constant 1 : index
    %c0_11 = arith.constant 0 : index
    %c0_12 = arith.constant 0 : index
    %12 = vector.load %arg4[%c0_10, %c1, %c0_11, %c0_12] : memref<1x3x144x128xf32, #tpu.memory_space<vmem>>, vector<1x1x144x128xf32>
    %13 = vector.shape_cast %12 : vector<1x1x144x128xf32> to vector<144x128xf32>
    %cst_13 = arith.constant dense<0.000000e+00> : vector<8x128xf32>
    %14 = tpu.matmul %11, %13, %cst_13 {dimension_numbers = #tpu.dot_dimension_numbers<[1], [0], [0], [1], [0, 0, 1, 1], [], []>} : vector<8x144xf32>, vector<144x128xf32>, vector<8x128xf32> -> vector<8x128xf32>
    %15 = arith.addf %10, %14 : vector<8x128xf32>
    %16 = vector.extract_strided_slice %4 {offsets = [2, 0], sizes = [8, 144], strides = [1, 1]} : vector<10x144xf32> to vector<8x144xf32>
    %c0_14 = arith.constant 0 : index
    %c2 = arith.constant 2 : index
    %c0_15 = arith.constant 0 : index
    %c0_16 = arith.constant 0 : index
    %17 = vector.load %arg4[%c0_14, %c2, %c0_15, %c0_16] : memref<1x3x144x128xf32, #tpu.memory_space<vmem>>, vector<1x1x144x128xf32>
    %18 = vector.shape_cast %17 : vector<1x1x144x128xf32> to vector<144x128xf32>
    %cst_17 = arith.constant dense<0.000000e+00> : vector<8x128xf32>
    %19 = tpu.matmul %16, %18, %cst_17 {dimension_numbers = #tpu.dot_dimension_numbers<[1], [0], [0], [1], [0, 0, 1, 1], [], []>} : vector<8x144xf32>, vector<144x128xf32>, vector<8x128xf32> -> vector<8x128xf32>
    %20 = arith.addf %15, %19 : vector<8x128xf32>
    %c0_18 = arith.constant 0 : index
    %c0_19 = arith.constant 0 : index
    %21 = vector.load %arg10[%c0_18, %c0_19] : memref<8x128xf32, #tpu.memory_space<vmem>>, vector<8x128xf32>
    tpu.vector_store %arg10[%c0_18, %c0_19], %20 {strides = array<i32>} : memref<8x128xf32, #tpu.memory_space<vmem>>, vector<8x128xf32>,
    %c2_i32 = arith.constant 2 : i32
    %22 = arith.cmpi eq, %arg2, %c2_i32 : i32
    %23 = arith.extui %22 : i1 to i32
    %c0_i32_20 = arith.constant 0 : i32
    %24 = arith.cmpi ne, %23, %c0_i32_20 : i32
    scf.if %24 {
      %c0_21 = arith.constant 0 : index
      %c0_22 = arith.constant 0 : index
      %25 = vector.load %arg10[%c0_21, %c0_22] : memref<8x128xf32, #tpu.memory_space<vmem>>, vector<8x128xf32>
      %c0_23 = arith.constant 0 : index
      %c0_24 = arith.constant 0 : index
      %26 = vector.load %arg5[%c0_23, %c0_24] : memref<1x128xf32, #tpu.memory_space<vmem>>, vector<1x128xf32>
      %27 = vector.broadcast %26 : vector<1x128xf32> to vector<8x128xf32>
      %28 = arith.addf %25, %27 : vector<8x128xf32>
      %cst_25 = arith.constant 0.000000e+00 : f32
      %29 = vector.broadcast %cst_25 : f32 to vector<8x128xf32>
      %30 = arith.cmpf oge, %28, %29 : vector<8x128xf32>
      %cst_26 = arith.constant 0.00999999977 : f32
      %31 = vector.broadcast %cst_26 : f32 to vector<8x128xf32>
      %32 = arith.mulf %31, %28 : vector<8x128xf32>
      %33 = arith.select %30, %28, %32 : vector<8x128xi1>, vector<8x128xf32>
      %c0_27 = arith.constant 0 : index
      %c0_28 = arith.constant 0 : index
      %c0_29 = arith.constant 0 : index
      %c0_30 = arith.constant 0 : index
      %34 = vector.load %arg6[%c0_27, %c0_28, %c0_29, %c0_30] : memref<1x1x8x64xf32, #tpu.memory_space<vmem>>, vector<1x1x8x64xf32>
      %35 = vector.shape_cast %34 : vector<1x1x8x64xf32> to vector<8x64xf32>
      %c0_31 = arith.constant 0 : index
      %c0_32 = arith.constant 0 : index
      %36 = vector.load %arg7[%c0_31, %c0_32] : memref<64x128xf32, #tpu.memory_space<vmem>>, vector<64x128xf32>
      %cst_33 = arith.constant dense<0.000000e+00> : vector<8x128xf32>
      %37 = tpu.matmul %35, %36, %cst_33 {dimension_numbers = #tpu.dot_dimension_numbers<[1], [0], [0], [1], [0, 0, 1, 1], [], []>} : vector<8x64xf32>, vector<64x128xf32>, vector<8x128xf32> -> vector<8x128xf32>
      %38 = arith.addf %33, %37 : vector<8x128xf32>
      %c0_34 = arith.constant 0 : index
      %c0_35 = arith.constant 0 : index
      %39 = vector.load %arg8[%c0_34, %c0_35] : memref<1x128xf32, #tpu.memory_space<vmem>>, vector<1x128xf32>
      %40 = vector.broadcast %39 : vector<1x128xf32> to vector<8x128xf32>
      %41 = arith.addf %38, %40 : vector<8x128xf32>
      %c0_36 = arith.constant 0 : index
      %c0_37 = arith.constant 0 : index
      %c0_38 = arith.constant 0 : index
      %c0_39 = arith.constant 0 : index
      %42 = vector.load %arg9[%c0_36, %c0_37, %c0_38, %c0_39] : memref<1x1x8x128xf32, #tpu.memory_space<vmem>>, vector<1x1x8x128xf32>
      %43 = vector.shape_cast %42 : vector<1x1x8x128xf32> to vector<8x128xf32>
      %44 = vector.shape_cast %41 : vector<8x128xf32> to vector<1x1x8x128xf32>
      tpu.vector_store %arg9[%c0_36, %c0_37, %c0_38, %c0_39], %44 {strides = array<i32>} : memref<1x1x8x128xf32, #tpu.memory_space<vmem>>, vector<1x1x8x128xf32>,
    } else {
    }
    return
  }
  func.func @transform_0(%arg0: i32, %arg1: i32, %arg2: i32) -> (i32, i32, i32, i32) {
    %0 = arith.addi %arg1, %arg2 : i32
    %c0_i32 = arith.constant 0 : i32
    %c0_i32_0 = arith.constant 0 : i32
    %c0_i32_1 = arith.constant 0 : i32
    return %arg0, %0, %c0_i32, %c0_i32_0 : i32, i32, i32, i32
  }
  func.func @transform_1(%arg0: i32, %arg1: i32, %arg2: i32) -> (i32, i32, i32, i32) {
    %c0_i32 = arith.constant 0 : i32
    %c0_i32_0 = arith.constant 0 : i32
    %c0_i32_1 = arith.constant 0 : i32
    %c0_i32_2 = arith.constant 0 : i32
    return %arg2, %c0_i32, %c0_i32_0, %c0_i32_1 : i32, i32, i32, i32
  }
  func.func @transform_2(%arg0: i32, %arg1: i32, %arg2: i32) -> (i32, i32) {
    %c0_i32 = arith.constant 0 : i32
    %c0_i32_0 = arith.constant 0 : i32
    %c0_i32_1 = arith.constant 0 : i32
    return %c0_i32, %c0_i32_0 : i32, i32
  }
  func.func @transform_3(%arg0: i32, %arg1: i32, %arg2: i32) -> (i32, i32, i32, i32) {
    %c0_i32 = arith.constant 0 : i32
    %c0_i32_0 = arith.constant 0 : i32
    %c0_i32_1 = arith.constant 0 : i32
    return %arg0, %arg1, %c0_i32, %c0_i32_0 : i32, i32, i32, i32
  }
  func.func @transform_4(%arg0: i32, %arg1: i32, %arg2: i32) -> (i32, i32) {
    %c0_i32 = arith.constant 0 : i32
    %c0_i32_0 = arith.constant 0 : i32
    %c0_i32_1 = arith.constant 0 : i32
    return %c0_i32, %c0_i32_0 : i32, i32
  }
  func.func @transform_5(%arg0: i32, %arg1: i32, %arg2: i32) -> (i32, i32) {
    %c0_i32 = arith.constant 0 : i32
    %c0_i32_0 = arith.constant 0 : i32
    %c0_i32_1 = arith.constant 0 : i32
    return %c0_i32, %c0_i32_0 : i32, i32
  }
  func.func @transform_6(%arg0: i32, %arg1: i32, %arg2: i32) -> (i32, i32, i32, i32) {
    %c0_i32 = arith.constant 0 : i32
    %c0_i32_0 = arith.constant 0 : i32
    %c0_i32_1 = arith.constant 0 : i32
    return %arg0, %arg1, %c0_i32, %c0_i32_0 : i32, i32, i32, i32
  }
}

</mosaic_0001>

<llo_original>
// kernel: tile.18
$region0: #{tile.18}
  #allocation0 [shape = 's32[1]{0}', space=sflag, size = 0x4, scoped, tag = 'scoped memory for tile.18']
  %s0 = inlined_call_operand.vmem [shape: f32[8], index: 0, kind: input, shape index: {}]
  %s1 = inlined_call_operand.vmem [shape: f32[16,8], index: 1, kind: output, shape index: {}]
  // Predicated region
  $region2: #{tile.18} parent=0 // pred_check
    _
  $region3: #{tile.18} parent=0 // pred_check_branch
    %3 = sbr.rel (0) target = $region5
  $region4: #{tile.18} parent=0 // pred_region
    _
  $region5: #{tile.18} parent=0 // pred_fallthru
    _
  %v4 = vld [vmem:[%s0] ss:$0 sm:$0xff]
  %5 = vst [vmem:[%s1] sm:$0xff] %v4
  %s6 = scalar_lea.vmem %s1, 8
  %7 = vst [vmem:[%s6] sm:$0xff] %v4

// kernel: tile.19
$region0: #{tile.19}
  %s0 = inlined_call_operand.vmem [shape: f32[16,8], index: 0, kind: input, shape index: {}]
  %s1 = inlined_call_operand.vmem [shape: f32[1,128], index: 1, kind: output, shape index: {}]
  $region1: #{tile.19} parent=0
    #allocation0 [shape = 'u8[4096]{0}', space=vmem, size = 0x1000, scoped, tag = 'scoped mem for output reshape']
    %v2 = vld [vmem:[%s0] sm:$0x1]
    %vm3 = vcmask 64512
    %4 = vst.msk [vmem:[#allocation0] sm:$0x1] %vm3, %v2
    %s5 = scalar_lea.vmem %s0, 15
    %v6 = vld [vmem:[%s5] sm:$0x1]
    %7 = vrot.lane.b32.xlu0 %v6, 120
    %v8 = vpop.permute.xlu0 %7
    %vm9 = vcmask 1048512
    %10 = vst.msk [vmem:[#allocation0] sm:$0x1] %vm9, %v8
    %s11 = scalar_lea.vmem %s0, 14
    %v12 = vld [vmem:[%s11] sm:$0x1]
    %13 = vrot.lane.b32.xlu0 %v12, 112
    %v14 = vpop.permute.xlu0 %13
    %vm15 = vcmask 982912
    %16 = vst.msk [vmem:[#allocation0] sm:$0x1] %vm15, %v14
    %s17 = scalar_lea.vmem %s0, 13
    %v18 = vld [vmem:[%s17] sm:$0x1]
    %19 = vrot.lane.b32.xlu0 %v18, 104
    %v20 = vpop.permute.xlu0 %19
    %vm21 = vcmask 917312
    %22 = vst.msk [vmem:[#allocation0] sm:$0x1] %vm21, %v20
    %s23 = scalar_lea.vmem %s0, 12
    %v24 = vld [vmem:[%s23] sm:$0x1]
    %25 = vrot.lane.b32.xlu0 %v24, 96
    %v26 = vpop.permute.xlu0 %25
    %vm27 = vcmask 851712
    %28 = vst.msk [vmem:[#allocation0] sm:$0x1] %vm27, %v26
    %s29 = scalar_lea.vmem %s0, 11
    %v30 = vld [vmem:[%s29] sm:$0x1]
    %31 = vrot.lane.b32.xlu0 %v30, 88
    %v32 = vpop.permute.xlu0 %31
    %vm33 = vcmask 786112
    %34 = vst.msk [vmem:[#allocation0] sm:$0x1] %vm33, %v32
    %s35 = scalar_lea.vmem %s0, 10
    %v36 = vld [vmem:[%s35] sm:$0x1]
    %37 = vrot.lane.b32.xlu0 %v36, 80
    %v38 = vpop.permute.xlu0 %37
    %vm39 = vcmask 720512
    %40 = vst.msk [vmem:[#allocation0] sm:$0x1] %vm39, %v38
    %s41 = scalar_lea.vmem %s0, 9
    %v42 = vld [vmem:[%s41] sm:$0x1]
    %43 = vrot.lane.b32.xlu0 %v42, 72
    %v44 = vpop.permute.xlu0 %43
    %vm45 = vcmask 654912
    %46 = vst.msk [vmem:[#allocation0] sm:$0x1] %vm45, %v44
    %s47 = scalar_lea.vmem %s0, 8
    %v48 = vld [vmem:[%s47] sm:$0x1]
    %49 = vrot.lane.b32.xlu0 %v48, 64
    %v50 = vpop.permute.xlu0 %49
    %vm51 = vcmask 589312
    %52 = vst.msk [vmem:[#allocation0] sm:$0x1] %vm51, %v50
    %s53 = scalar_lea.vmem %s0, 7
    %v54 = vld [vmem:[%s53] sm:$0x1]
    %55 = vrot.lane.b32.xlu0 %v54, 56
    %v56 = vpop.permute.xlu0 %55
    %vm57 = vcmask 523712
    %58 = vst.msk [vmem:[#allocation0] sm:$0x1] %vm57, %v56
    %s59 = scalar_lea.vmem %s0, 6
    %v60 = vld [vmem:[%s59] sm:$0x1]
    %61 = vrot.lane.b32.xlu0 %v60, 48
    %v62 = vpop.permute.xlu0 %61
    %vm63 = vcmask 458112
    %64 = vst.msk [vmem:[#allocation0] sm:$0x1] %vm63, %v62
    %s65 = scalar_lea.vmem %s0, 5
    %v66 = vld [vmem:[%s65] sm:$0x1]
    %67 = vrot.lane.b32.xlu0 %v66, 40
    %v68 = vpop.permute.xlu0 %67
    %vm69 = vcmask 392512
    %70 = vst.msk [vmem:[#allocation0] sm:$0x1] %vm69, %v68
    %s71 = scalar_lea.vmem %s0, 4
    %v72 = vld [vmem:[%s71] sm:$0x1]
    %73 = vrot.lane.b32.xlu0 %v72, 32
    %v74 = vpop.permute.xlu0 %73
    %vm75 = vcmask 326912
    %76 = vst.msk [vmem:[#allocation0] sm:$0x1] %vm75, %v74
    %s77 = scalar_lea.vmem %s0, 3
    %v78 = vld [vmem:[%s77] sm:$0x1]
    %79 = vrot.lane.b32.xlu0 %v78, 24
    %v80 = vpop.permute.xlu0 %79
    %vm81 = vcmask 261312
    %82 = vst.msk [vmem:[#allocation0] sm:$0x1] %vm81, %v80
    %s83 = scalar_lea.vmem %s0, 2
    %v84 = vld [vmem:[%s83] sm:$0x1]
    %85 = vrot.lane.b32.xlu0 %v84, 16
    %v86 = vpop.permute.xlu0 %85
    %vm87 = vcmask 195712
    %88 = vst.msk [vmem:[#allocation0] sm:$0x1] %vm87, %v86
    %s89 = scalar_lea.vmem %s0, 1
    %v90 = vld [vmem:[%s89] sm:$0x1]
    %91 = vrot.lane.b32.xlu0 %v90, 8
    %v92 = vpop.permute.xlu0 %91
    %vm93 = vcmask 130112
    %94 = vst.msk [vmem:[#allocation0] sm:$0x1] %vm93, %v92
    %s96 = sshll.u32 1, 1
    %s97 = ssub.s32 %s96, 1
    %v99 = vld [vmem:[#allocation0] sm:%s97]
    %s100 = sshll.u32 1, 1
    %s101 = ssub.s32 %s100, 1
    %102 = vst [vmem:[%s1] sm:%s101] %v99

// kernel: residual_block3d.2
$region0: #{residual_block3d.2}
  #allocation0 [shape = 'u32[]', space=smem, size = 0x4, offset = 0x4, fixed_abs, tag = 'smem constant byte address 0x4 - core index']
  #allocation1 [shape = 'u32[144,128]{1,0:T(1,128)}', space=vmem, size = 0x12000, scoped, tag = 'internal scratch']
  #allocation2 [shape = 'f32[8,128]{1,0:T(8,128)}', space=vmem, size = 0x1000, scoped, tag = 'scratch operand']
  %s0 = inlined_call_operand.vmem [shape: f32[2,10,10,72], index: 0, kind: input, shape index: {}]
  %s1 = inlined_call_operand.vmem [shape: f32[3,3,72,128], index: 1, kind: input, shape index: {}]
  %s2 = inlined_call_operand.vmem [shape: f32[1,128], index: 2, kind: input, shape index: {}]
  %s3 = inlined_call_operand.vmem [shape: f32[2,8,8,128], index: 3, kind: output, shape index: {}]
  %s4 = sld [smem:[#allocation0]]
  $region53: #{residual_block3d.2} parent=0
    _
  %s6 = ssub.s32 1, %s4
  %s7 = scalar_select 0, %s6, %s4
  loop: start=0, step=1, limit=50
  $region2: #{residual_block3d.2} parent=0 // loop_pre_header
    _
  $region3: #{residual_block3d.2} parent=0 // loop_header
    %s9 = sphi 0, %s13
    %p10 = scmp.ge.s32.totalorder %s9, 50
    %s16 = sphi 0, %s35
    %s17 = sphi 0, %s31
    %s18 = sphi 0, %s27
    %s19 = sphi 0, %s16
    %s20 = sphi 0, %s17
    %s21 = sphi 0, %s18
    %s22 = sphi 0, %s19
    %s23 = sphi 0, %s20
    %s24 = sphi 0, %s21
    %s42 = sphi 0, %s44
    %s45 = sphi 0, %s42
    %s46 = sphi 0, %s45
    %s62 = sphi 0, %s46
    %s68 = sphi 0, %s70
    %s71 = sphi 0, %s68
    %s72 = sphi 0, %s71
    %s88 = sphi 0, %s72
    %s92 = sphi 0, %s92
    %s94 = sphi 0, %s92
    %s95 = sphi 0, %s94
    %s109 = sphi 0, %s95
    %s117 = sphi 0, %s119
    %s120 = sphi 0, %s117
    %s121 = sphi 0, %s120
    %s137 = sphi 0, %s121
  $region4: #{residual_block3d.2} parent=0 // loop_header_branch
    %12 = sbr.rel (%p10) target = $region8
  $region5: #{residual_block3d.2} parent=0 // loop_body
    %s14 = ssub.s32 %s9, 1
    %s15 = ssub.s32 %s9, 2
    %s25 = sadd.s32 1, %s18
    %p26 = scmp.ge.s32.totalorder %s25, 3
    %s27 = scalar_select %p26, 0, %s25
    %s28 = sadd.s32 1, %s17
    %s29 = scalar_select %p26, %s28, %s17
    %p30 = scmp.ge.s32.totalorder %s29, 8
    %s31 = scalar_select %p30, 0, %s29
    %s32 = sadd.s32 1, %s16
    %s33 = scalar_select %p30, %s32, %s16
    %p34 = scmp.ge.s32.totalorder %s33, 2
    %s35 = scalar_select %p34, 0, %s33
    %s36 = sadd.s32 %s17, %s18
    %s37 = sadd.s32 %s31, %s27
    %s38 = ssub.s32 %s16, %s35
    %s39 = ssub.s32 %s36, %s37
    %s40 = sor.u32 %s38, %s39
    %p41 = scmp.eq.s32.totalorder %s40, 0
    %s43 = sadd.s32 %s42, 1
    %s44 = scalar_select %p41, %s42, %s43
    %p47 = pneg %p41
    %p48 = scmp.eq.s32.totalorder %s9, 47
    %p49 = por %p47, %p48
    %p50 = scmp.ne.s32.totalorder %s42, %s45
    %p51 = scmp.eq.s32.totalorder %s9, 0
    %p52 = por %p50, %p51
    %p53 = scmp.ne.s32.totalorder %s42, %s45
    %p54 = scmp.eq.s32.totalorder %s14, 47
    %p55 = por %p53, %p54
    %p56 = scmp.ne.s32.totalorder %s45, %s46
    %p57 = scmp.eq.s32.totalorder %s14, 0
    %p58 = por %p56, %p57
    %p59 = scmp.ne.s32.totalorder %s45, %s46
    %p60 = scmp.eq.s32.totalorder %s15, 47
    %p61 = por %p59, %p60
    %p63 = scmp.ne.s32.totalorder %s46, %s62
    %p64 = scmp.eq.s32.totalorder %s15, 0
    %p65 = por %p63, %p64
    %s66 = ssub.s32 %s18, %s27
    %p67 = scmp.eq.s32.totalorder %s66, 0
    %s69 = sadd.s32 %s68, 1
    %s70 = scalar_select %p67, %s68, %s69
    %p73 = pneg %p67
    %p74 = scmp.eq.s32.totalorder %s9, 47
    %p75 = por %p73, %p74
    %p76 = scmp.ne.s32.totalorder %s68, %s71
    %p77 = scmp.eq.s32.totalorder %s9, 0
    %p78 = por %p76, %p77
    %p79 = scmp.ne.s32.totalorder %s68, %s71
    %p80 = scmp.eq.s32.totalorder %s14, 47
    %p81 = por %p79, %p80
    %p82 = scmp.ne.s32.totalorder %s71, %s72
    %p83 = scmp.eq.s32.totalorder %s14, 0
    %p84 = por %p82, %p83
    %p85 = scmp.ne.s32.totalorder %s71, %s72
    %p86 = scmp.eq.s32.totalorder %s15, 47
    %p87 = por %p85, %p86
    %p89 = scmp.ne.s32.totalorder %s72, %s88
    %p90 = scmp.eq.s32.totalorder %s15, 0
    %p91 = por %p89, %p90
    %s93 = sadd.s32 %s92, 1
    %p96 = scmp.eq.s32.totalorder %s9, 47
    %p97 = scmp.ne.s32.totalorder %s92, %s94
    %p98 = scmp.eq.s32.totalorder %s9, 0
    %p99 = por %p97, %p98
    %p100 = scmp.ne.s32.totalorder %s92, %s94
    %p101 = scmp.eq.s32.totalorder %s14, 47
    %p102 = por %p100, %p101
    %p103 = scmp.ne.s32.totalorder %s94, %s95
    %p104 = scmp.eq.s32.totalorder %s14, 0
    %p105 = por %p103, %p104
    %p106 = scmp.ne.s32.totalorder %s94, %s95
    %p107 = scmp.eq.s32.totalorder %s15, 47
    %p108 = por %p106, %p107
    %p110 = scmp.ne.s32.totalorder %s95, %s109
    %p111 = scmp.eq.s32.totalorder %s15, 0
    %p112 = por %p110, %p111
    %s113 = ssub.s32 %s16, %s35
    %s114 = ssub.s32 %s17, %s31
    %s115 = sor.u32 %s113, %s114
    %p116 = scmp.eq.s32.totalorder %s115, 0
    %s118 = sadd.s32 %s117, 1
    %s119 = scalar_select %p116, %s117, %s118
    %p122 = pneg %p116
    %p123 = scmp.eq.s32.totalorder %s9, 47
    %p124 = por %p122, %p123
    %p125 = scmp.ne.s32.totalorder %s117, %s120
    %p126 = scmp.eq.s32.totalorder %s9, 0
    %p127 = por %p125, %p126
    %p128 = scmp.ne.s32.totalorder %s117, %s120
    %p129 = scmp.eq.s32.totalorder %s14, 47
    %p130 = por %p128, %p129
    %p131 = scmp.ne.s32.totalorder %s120, %s121
    %p132 = scmp.eq.s32.totalorder %s14, 0
    %p133 = por %p131, %p132
    %p134 = scmp.ne.s32.totalorder %s120, %s121
    %p135 = scmp.eq.s32.totalorder %s15, 47
    %p136 = por %p134, %p135
    %p138 = scmp.ne.s32.totalorder %s121, %s137
    %p139 = scmp.eq.s32.totalorder %s15, 0
    %p140 = por %p138, %p139
    %p141 = scmp.le.s32.totalorder 1, %s9
    %p142 = scmp.lt.s32.totalorder %s9, 49
    %p143 = pnand %p141, %p142
    %p144 = pneg %p143
    // Predicated region
    $region9: #{residual_block3d.2} parent=5 // pred_check
      _
    $region10: #{residual_block3d.2} parent=5 // pred_check_branch
      %146 = sbr.rel (%p143) target = $region12
    $region11: #{residual_block3d.2} parent=5 // pred_region
      %s147 = ssub.s32 %s9, 1
      // Predicated region
      $region13: #{residual_block3d.2} parent=11 // pred_check
        %p148 = pneg %p105
      $region14: #{residual_block3d.2} parent=11 // pred_check_branch
        %150 = sbr.rel (%p148) target = $region16
      $region15: #{residual_block3d.2} parent=11 // pred_region
        _
      $region16: #{residual_block3d.2} parent=11 // pred_fallthru
        _
    $region12: #{residual_block3d.2} parent=5 // pred_fallthru
      _
    %p151 = scmp.lt.s32.totalorder %s9, 48
    // Predicated region
    $region17: #{residual_block3d.2} parent=5 // pred_check
      %p152 = pneg %p151
    $region18: #{residual_block3d.2} parent=5 // pred_check_branch
      %154 = sbr.rel (%p152) target = $region20
    $region19: #{residual_block3d.2} parent=5 // pred_region
      // Predicated region
      $region21: #{residual_block3d.2} parent=19 // pred_check
        %p155 = pneg %p52
      $region22: #{residual_block3d.2} parent=19 // pred_check_branch
        %157 = sbr.rel (%p155) target = $region24
      $region23: #{residual_block3d.2} parent=19 // pred_region
        %s158 = sadd.s32 %s17, %s18
        %p159 = scmp.lt.s32.totalorder %s16, 1
        %s160 = scalar_select %p159, %s16, 1
        %p161 = scmp.lt.s32.totalorder %s158, 9
        %s162 = scalar_select %p161, %s158, 9
        %s163 = smul.addr %s162, 2
        %s164 = smul.addr %s160, 20
        %s165 = sadd.s32 %s163, %s164
        %s166 = smul.addr %s165, 8
        %s167 = scalar_lea.vmem %s0, %s166
        %s168 = sadd.s32 %s17, %s18
      $region24: #{residual_block3d.2} parent=19 // pred_fallthru
        _
      // Predicated region
      $region25: #{residual_block3d.2} parent=19 // pred_check
        %p169 = pneg %p78
      $region26: #{residual_block3d.2} parent=19 // pred_check_branch
        %171 = sbr.rel (%p169) target = $region28
      $region27: #{residual_block3d.2} parent=19 // pred_region
        %p172 = scmp.lt.s32.totalorder %s18, 2
        %s173 = scalar_select %p172, %s18, 2
        %s174 = smul.addr %s173, 27
        %s175 = smul.addr %s174, 8
        %s176 = scalar_lea.vmem %s1, %s175
      $region28: #{residual_block3d.2} parent=19 // pred_fallthru
        _
    $region20: #{residual_block3d.2} parent=5 // pred_fallthru
      _
    %p177 = scmp.le.s32.totalorder 1, %s9
    %p178 = scmp.lt.s32.totalorder %s9, 49
    %p179 = pnand %p177, %p178
    %p180 = pneg %p179
    // Predicated region
    $region29: #{residual_block3d.2} parent=5 // pred_check
      _
    $region30: #{residual_block3d.2} parent=5 // pred_check_branch
      %182 = sbr.rel (%p179) target = $region32
    $region31: #{residual_block3d.2} parent=5 // pred_region
      %s183 = ssub.s32 %s9, 1
      %s184 = sadd.s32 %s20, %s21
      %p185 = scmp.lt.s32.totalorder %s19, 1
      %s186 = scalar_select %p185, %s19, 1
      %p187 = scmp.lt.s32.totalorder %s184, 9
      %s188 = scalar_select %p187, %s184, 9
      %s189 = smul.addr %s188, 2
      %s190 = smul.addr %s186, 20
      %s191 = sadd.s32 %s189, %s190
      %s192 = smul.addr %s191, 8
      %s193 = scalar_lea.vmem %s0, %s192
      %p194 = pneg %p58
      %p195 = pneg %p55
      %p196 = scmp.lt.s32.totalorder %s21, 2
      %s197 = scalar_select %p196, %s21, 2
      %s198 = smul.addr %s197, 27
      %s199 = smul.addr %s198, 8
      %s200 = scalar_lea.vmem %s1, %s199
      %p201 = pneg %p84
      %p202 = pneg %p81
      %p203 = pneg %p105
      %p204 = pneg %p102
      %p205 = pneg %p133
      %p206 = pneg %p130
      %p207 = scmp.lt.s32.totalorder %s19, 1
      %s208 = scalar_select %p207, %s19, 1
      %p209 = scmp.lt.s32.totalorder %s20, 7
      %s210 = scalar_select %p209, %s20, 7
      %s211 = smul.addr %s208, 8
      %s212 = sadd.s32 %s210, %s211
      %s213 = smul.addr %s212, 8
      %s214 = scalar_lea.vmem %s3, %s213
      %s215 = sadd.s32 %s20, %s21
      %p216 = scmp.lt.s32.totalorder %s19, 1
      %s217 = scalar_select %p216, %s19, 1
      %p218 = scmp.lt.s32.totalorder %s215, 9
      %s219 = scalar_select %p218, %s215, 9
      %s220 = smul.addr %s219, 2
      %s221 = smul.addr %s217, 20
      %s222 = sadd.s32 %s220, %s221
      %s223 = smul.addr %s222, 8
      %s224 = scalar_lea.vmem %s0, %s223
      %s225 = sadd.s32 %s20, %s21
      %p226 = scmp.lt.s32.totalorder %s21, 2
      %s227 = scalar_select %p226, %s21, 2
      %s228 = smul.addr %s227, 27
      %s229 = smul.addr %s228, 8
      %s230 = scalar_lea.vmem %s1, %s229
      %p231 = scmp.lt.s32.totalorder %s19, 1
      %s232 = scalar_select %p231, %s19, 1
      %p233 = scmp.lt.s32.totalorder %s20, 7
      %s234 = scalar_select %p233, %s20, 7
      %s235 = smul.addr %s232, 8
      %s236 = sadd.s32 %s234, %s235
      %s237 = smul.addr %s236, 8
      %s238 = scalar_lea.vmem %s3, %s237
      %p239 = scmp.eq.s32.totalorder %s21, 0
      // Predicated region
      $region33: #{residual_block3d.2} parent=31 // pred_check
        %p240 = pneg %p239
      $region34: #{residual_block3d.2} parent=31 // pred_check_branch
        %242 = sbr.rel (%p240) target = $region36
      $region35: #{residual_block3d.2} parent=31 // pred_region
        %243 = vst [vmem:[#allocation2] sm:$0xff] 0.0
      $region36: #{residual_block3d.2} parent=31 // pred_fallthru
        _
      %v244 = vld [vmem:[%s224] sm:$0xff]
      %v245 = vld [vmem:[%s224 + $0x8] sm:$0x3]
      %v246 = vld [vmem:[#allocation2] sm:$0xff]
      %v247 = vld [vmem:[%s230] sm:$0xff]
      %v248 = vld [vmem:[%s230 + $0x8] sm:$0xff]
      %v249 = vld [vmem:[%s230 + $0x10] sm:$0xff]
      %v250 = vld [vmem:[%s230 + $0x18] sm:$0xff]
      %v251 = vld [vmem:[%s230 + $0x20] sm:$0xff]
      %v252 = vld [vmem:[%s230 + $0x28] sm:$0xff]
      %v253 = vld [vmem:[%s230 + $0x30] sm:$0xff]
      %v254 = vld [vmem:[%s230 + $0x38] sm:$0xff]
      %v255 = vld [vmem:[%s230 + $0x40] sm:$0xff]
      %vm256 = vcmask 588800
      %v258 = vsel %vm256, %v244, 0
      %260 = vmatprep.subr.mxu0 0.0
      %261 = vmatpush1.msra.mxu0 0.0
      %262 = vmatprep.subr.mxu0 0.0
      %263 = vmatpush1.msra.mxu0 0.0
      %264 = vmatprep.subr.mxu0 0.0
      %265 = vmatpush1.msra.mxu0 0.0
      %266 = vmatprep.subr.mxu0 0.0
      %267 = vmatpush1.msra.mxu0 0.0
      %268 = vmatprep.subr.mxu0 0.0
      %269 = vmatpush1.msra.mxu0 0.0
      %270 = vmatprep.subr.mxu0 0.0
      %271 = vmatpush1.msra.mxu0 0.0
      %272 = vmatprep.subr.mxu0 0.0
      %273 = vmatpush1.msra.mxu0 0.0
      %274 = vmatprep.subr.mxu0 0.0
      %275 = vmatpush1.msra.mxu0 %v255
      %276 = vmatprep.subr.mxu0 0.0
      %277 = vmatpush1.msra.mxu0 %v254
      %278 = vmatprep.subr.mxu0 0.0
      %279 = vmatpush1.msra.mxu0 %v253
      %280 = vmatprep.subr.mxu0 0.0
      %281 = vmatpush1.msra.mxu0 %v252
      %282 = vmatprep.subr.mxu0 0.0
      %283 = vmatpush1.msra.mxu0 %v251
      %284 = vmatprep.subr.mxu0 0.0
      %285 = vmatpush1.msra.mxu0 %v250
      %286 = vmatprep.subr.mxu0 0.0
      %287 = vmatpush1.msra.mxu0 %v249
      %288 = vmatprep.subr.mxu0 0.0
      %289 = vmatpush1.msra.mxu0 %v248
      %290 = vmatprep.subr.mxu0 0.0
      %291 = vmatpush1.msra.mxu0 %v247
      %292 = vmatprep.subr.mxu0 0.0
      %293 = vmatpush2.msra.mxu0 0.0
      %294 = vmatprep.subr.mxu0 0.0
      %295 = vmatpush2.msra.mxu0 0.0
      %296 = vmatprep.subr.mxu0 0.0
      %297 = vmatpush2.msra.mxu0 0.0
      %298 = vmatprep.subr.mxu0 0.0
      %299 = vmatpush2.msra.mxu0 0.0
      %300 = vmatprep.subr.mxu0 0.0
      %301 = vmatpush2.msra.mxu0 0.0
      %302 = vmatprep.subr.mxu0 0.0
      %303 = vmatpush2.msra.mxu0 0.0
      %304 = vmatprep.subr.mxu0 0.0
      %305 = vmatpush2.msra.mxu0 0.0
      %306 = vmatprep.subr.mxu0 0.0
      %307 = vmatpush2.msra.mxu0 0.0
      %308 = vmatprep.subr.mxu0 0.0
      %309 = vmatpush2.msra.mxu0 0.0
      %310 = vmatprep.subr.mxu0 0.0
      %311 = vmatpush2.msra.mxu0 0.0
      %312 = vmatprep.subr.mxu0 0.0
      %313 = vmatpush2.msra.mxu0 0.0
      %314 = vmatprep.subr.mxu0 0.0
      %315 = vmatpush2.msra.mxu0 0.0
      %316 = vmatprep.subr.mxu0 0.0
      %317 = vmatpush2.msra.mxu0 0.0
      %318 = vmatprep.subr.mxu0 0.0
      %319 = vmatpush2.msra.mxu0 0.0
      %320 = vmatprep.subr.mxu0 0.0
      %321 = vmatpush2.msra.mxu0 0.0
      %322 = vmatprep.subr.mxu0 0.0
      %323 = vmatpush2.msra.mxu0 0.0
      %324 = vmatprep.mubr.f32.mxu0 0.0
      %325 = vmatmul.mubr.f32.gmra.mxu0 %v258
      %v326 = vpop.f32.mrf.mxu0
      %v327 = vadd.f32 0.0, %v326
      %v328 = vpop.f32.mrf.mxu0
      %329 = vdwg.mxu0
      %v330 = vadd.f32 %v246, %v327
      %s331 = scalar_lea.vmem %s230, 72
      %v332 = vld [vmem:[%s331] sm:$0xff]
      %v333 = vld [vmem:[%s331 + $0x8] sm:$0xff]
      %v334 = vld [vmem:[%s331 + $0x10] sm:$0xff]
      %v335 = vld [vmem:[%s331 + $0x18] sm:$0xff]
      %v336 = vld [vmem:[%s331 + $0x20] sm:$0xff]
      %v337 = vld [vmem:[%s331 + $0x28] sm:$0xff]
      %v338 = vld [vmem:[%s331 + $0x30] sm:$0xff]
      %v339 = vld [vmem:[%s331 + $0x38] sm:$0xff]
      %v340 = vld [vmem:[%s331 + $0x40] sm:$0xff]
      %vm342 = vcmask 1046528
      %v343 = vrot.slane %v244, 1
      %v344 = vrot.slane %v245, 1
      %v345 = vsel %vm342, %v343, %v344
      %v346 = vsel %vm256, %v345, 0
      %348 = vmatprep.subr.mxu0 0.0
      %349 = vmatpush1.msra.mxu0 0.0
      %350 = vmatprep.subr.mxu0 0.0
      %351 = vmatpush1.msra.mxu0 0.0
      %352 = vmatprep.subr.mxu0 0.0
      %353 = vmatpush1.msra.mxu0 0.0
      %354 = vmatprep.subr.mxu0 0.0
      %355 = vmatpush1.msra.mxu0 0.0
      %356 = vmatprep.subr.mxu0 0.0
      %357 = vmatpush1.msra.mxu0 0.0
      %358 = vmatprep.subr.mxu0 0.0
      %359 = vmatpush1.msra.mxu0 0.0
      %360 = vmatprep.subr.mxu0 0.0
      %361 = vmatpush1.msra.mxu0 0.0
      %362 = vmatprep.subr.mxu0 0.0
      %363 = vmatpush1.msra.mxu0 %v340
      %364 = vmatprep.subr.mxu0 0.0
      %365 = vmatpush1.msra.mxu0 %v339
      %366 = vmatprep.subr.mxu0 0.0
      %367 = vmatpush1.msra.mxu0 %v338
      %368 = vmatprep.subr.mxu0 0.0
      %369 = vmatpush1.msra.mxu0 %v337
      %370 = vmatprep.subr.mxu0 0.0
      %371 = vmatpush1.msra.mxu0 %v336
      %372 = vmatprep.subr.mxu0 0.0
      %373 = vmatpush1.msra.mxu0 %v335
      %374 = vmatprep.subr.mxu0 0.0
      %375 = vmatpush1.msra.mxu0 %v334
      %376 = vmatprep.subr.mxu0 0.0
      %377 = vmatpush1.msra.mxu0 %v333
      %378 = vmatprep.subr.mxu0 0.0
      %379 = vmatpush1.msra.mxu0 %v332
      %380 = vmatprep.subr.mxu0 0.0
      %381 = vmatpush2.msra.mxu0 0.0
      %382 = vmatprep.subr.mxu0 0.0
      %383 = vmatpush2.msra.mxu0 0.0
      %384 = vmatprep.subr.mxu0 0.0
      %385 = vmatpush2.msra.mxu0 0.0
      %386 = vmatprep.subr.mxu0 0.0
      %387 = vmatpush2.msra.mxu0 0.0
      %388 = vmatprep.subr.mxu0 0.0
      %389 = vmatpush2.msra.mxu0 0.0
      %390 = vmatprep.subr.mxu0 0.0
      %391 = vmatpush2.msra.mxu0 0.0
      %392 = vmatprep.subr.mxu0 0.0
      %393 = vmatpush2.msra.mxu0 0.0
      %394 = vmatprep.subr.mxu0 0.0
      %395 = vmatpush2.msra.mxu0 0.0
      %396 = vmatprep.subr.mxu0 0.0
      %397 = vmatpush2.msra.mxu0 0.0
      %398 = vmatprep.subr.mxu0 0.0
      %399 = vmatpush2.msra.mxu0 0.0
      %400 = vmatprep.subr.mxu0 0.0
      %401 = vmatpush2.msra.mxu0 0.0
      %402 = vmatprep.subr.mxu0 0.0
      %403 = vmatpush2.msra.mxu0 0.0
      %404 = vmatprep.subr.mxu0 0.0
      %405 = vmatpush2.msra.mxu0 0.0
      %406 = vmatprep.subr.mxu0 0.0
      %407 = vmatpush2.msra.mxu0 0.0
      %408 = vmatprep.subr.mxu0 0.0
      %409 = vmatpush2.msra.mxu0 0.0
      %410 = vmatprep.subr.mxu0 0.0
      %411 = vmatpush2.msra.mxu0 0.0
      %412 = vmatprep.mubr.f32.mxu0 0.0
      %413 = vmatmul.mubr.f32.gmra.mxu0 %v346
      %v414 = vpop.f32.mrf.mxu0
      %v415 = vadd.f32 0.0, %v414
      %v416 = vpop.f32.mrf.mxu0
      %417 = vdwg.mxu0
      %v418 = vadd.f32 %v330, %v415
      %s419 = scalar_lea.vmem %s230, 144
      %v420 = vld [vmem:[%s419] sm:$0xff]
      %v421 = vld [vmem:[%s419 + $0x8] sm:$0xff]
      %v422 = vld [vmem:[%s419 + $0x10] sm:$0xff]
      %v423 = vld [vmem:[%s419 + $0x18] sm:$0xff]
      %v424 = vld [vmem:[%s419 + $0x20] sm:$0xff]
      %v425 = vld [vmem:[%s419 + $0x28] sm:$0xff]
      %v426 = vld [vmem:[%s419 + $0x30] sm:$0xff]
      %v427 = vld [vmem:[%s419 + $0x38] sm:$0xff]
      %v428 = vld [vmem:[%s419 + $0x40] sm:$0xff]
      %vm429 = vcmask 1045504
      %v430 = vrot.slane %v244, 2
      %v431 = vrot.slane %v245, 2
      %v432 = vsel %vm429, %v430, %v431
      %v433 = vsel %vm256, %v432, 0
      %435 = vmatprep.subr.mxu0 0.0
      %436 = vmatpush1.msra.mxu0 0.0
      %437 = vmatprep.subr.mxu0 0.0
      %438 = vmatpush1.msra.mxu0 0.0
      %439 = vmatprep.subr.mxu0 0.0
      %440 = vmatpush1.msra.mxu0 0.0
      %441 = vmatprep.subr.mxu0 0.0
      %442 = vmatpush1.msra.mxu0 0.0
      %443 = vmatprep.subr.mxu0 0.0
      %444 = vmatpush1.msra.mxu0 0.0
      %445 = vmatprep.subr.mxu0 0.0
      %446 = vmatpush1.msra.mxu0 0.0
      %447 = vmatprep.subr.mxu0 0.0
      %448 = vmatpush1.msra.mxu0 0.0
      %449 = vmatprep.subr.mxu0 0.0
      %450 = vmatpush1.msra.mxu0 %v428
      %451 = vmatprep.subr.mxu0 0.0
      %452 = vmatpush1.msra.mxu0 %v427
      %453 = vmatprep.subr.mxu0 0.0
      %454 = vmatpush1.msra.mxu0 %v426
      %455 = vmatprep.subr.mxu0 0.0
      %456 = vmatpush1.msra.mxu0 %v425
      %457 = vmatprep.subr.mxu0 0.0
      %458 = vmatpush1.msra.mxu0 %v424
      %459 = vmatprep.subr.mxu0 0.0
      %460 = vmatpush1.msra.mxu0 %v423
      %461 = vmatprep.subr.mxu0 0.0
      %462 = vmatpush1.msra.mxu0 %v422
      %463 = vmatprep.subr.mxu0 0.0
      %464 = vmatpush1.msra.mxu0 %v421
      %465 = vmatprep.subr.mxu0 0.0
      %466 = vmatpush1.msra.mxu0 %v420
      %467 = vmatprep.subr.mxu0 0.0
      %468 = vmatpush2.msra.mxu0 0.0
      %469 = vmatprep.subr.mxu0 0.0
      %470 = vmatpush2.msra.mxu0 0.0
      %471 = vmatprep.subr.mxu0 0.0
      %472 = vmatpush2.msra.mxu0 0.0
      %473 = vmatprep.subr.mxu0 0.0
      %474 = vmatpush2.msra.mxu0 0.0
      %475 = vmatprep.subr.mxu0 0.0
      %476 = vmatpush2.msra.mxu0 0.0
      %477 = vmatprep.subr.mxu0 0.0
      %478 = vmatpush2.msra.mxu0 0.0
      %479 = vmatprep.subr.mxu0 0.0
      %480 = vmatpush2.msra.mxu0 0.0
      %481 = vmatprep.subr.mxu0 0.0
      %482 = vmatpush2.msra.mxu0 0.0
      %483 = vmatprep.subr.mxu0 0.0
      %484 = vmatpush2.msra.mxu0 0.0
      %485 = vmatprep.subr.mxu0 0.0
      %486 = vmatpush2.msra.mxu0 0.0
      %487 = vmatprep.subr.mxu0 0.0
      %488 = vmatpush2.msra.mxu0 0.0
      %489 = vmatprep.subr.mxu0 0.0
      %490 = vmatpush2.msra.mxu0 0.0
      %491 = vmatprep.subr.mxu0 0.0
      %492 = vmatpush2.msra.mxu0 0.0
      %493 = vmatprep.subr.mxu0 0.0
      %494 = vmatpush2.msra.mxu0 0.0
      %495 = vmatprep.subr.mxu0 0.0
      %496 = vmatpush2.msra.mxu0 0.0
      %497 = vmatprep.subr.mxu0 0.0
      %498 = vmatpush2.msra.mxu0 0.0
      %499 = vmatprep.mubr.f32.mxu0 0.0
      %500 = vmatmul.mubr.f32.gmra.mxu0 %v433
      %v501 = vpop.f32.mrf.mxu0
      %v502 = vadd.f32 0.0, %v501
      %v503 = vpop.f32.mrf.mxu0
      %504 = vdwg.mxu0
      %v505 = vadd.f32 %v418, %v502
      %506 = vst [vmem:[#allocation2] sm:$0xff] %v505
      %p507 = scmp.eq.s32.totalorder %s21, 2
      // Predicated region
      $region37: #{residual_block3d.2} parent=31 // pred_check
        %p508 = pneg %p507
      $region38: #{residual_block3d.2} parent=31 // pred_check_branch
        %510 = sbr.rel (%p508) target = $region40
      $region39: #{residual_block3d.2} parent=31 // pred_region
        %v511 = vld [vmem:[#allocation2] sm:$0xff]
        %v512 = vld [vmem:[%s2] sm:$0x1]
        %v514 = vlaneseq
        %v515 = vshrl.u32 %v514, 7
        %v516 = vsub.s32 0, %v515
        %v517 = vrot.slane %v512, %v516
        %v519 = vadd.f32 %v511, %v517
        %vm520 = vcmp.ge.f32.partialorder %v519, 0.0
        %v521 = vmul.f32 %v519, 0.01
        %v522 = vsel %vm520, %v519, %v521
        %523 = vst [vmem:[%s238] sm:$0xff] %v522
      $region40: #{residual_block3d.2} parent=31 // pred_fallthru
        _
      %p524 = scmp.lt.s32.totalorder %s19, 1
      %s525 = scalar_select %p524, %s19, 1
      %p526 = scmp.lt.s32.totalorder %s20, 7
      %s527 = scalar_select %p526, %s20, 7
      %s528 = smul.addr %s525, 8
      %s529 = sadd.s32 %s527, %s528
      %s530 = smul.addr %s529, 8
      %s531 = scalar_lea.vmem %s3, %s530
      // Predicated region
      $region41: #{residual_block3d.2} parent=31 // pred_check
        %p532 = pneg %p130
      $region42: #{residual_block3d.2} parent=31 // pred_check_branch
        %534 = sbr.rel (%p532) target = $region44
      $region43: #{residual_block3d.2} parent=31 // pred_region
        _
      $region44: #{residual_block3d.2} parent=31 // pred_fallthru
        _
    $region32: #{residual_block3d.2} parent=5 // pred_fallthru
      _
    %p535 = scmp.le.s32.totalorder 2, %s9
    // Predicated region
    $region45: #{residual_block3d.2} parent=5 // pred_check
      %p536 = pneg %p535
    $region46: #{residual_block3d.2} parent=5 // pred_check_branch
      %538 = sbr.rel (%p536) target = $region48
    $region47: #{residual_block3d.2} parent=5 // pred_region
      %s539 = ssub.s32 %s9, 2
      // Predicated region
      $region49: #{residual_block3d.2} parent=47 // pred_check
        %p540 = pneg %p136
      $region50: #{residual_block3d.2} parent=47 // pred_check_branch
        %542 = sbr.rel (%p540) target = $region52
      $region51: #{residual_block3d.2} parent=47 // pred_region
        %p543 = scmp.lt.s32.totalorder %s22, 1
        %s544 = scalar_select %p543, %s22, 1
        %p545 = scmp.lt.s32.totalorder %s23, 7
        %s546 = scalar_select %p545, %s23, 7
        %s547 = smul.addr %s544, 8
        %s548 = sadd.s32 %s546, %s547
        %s549 = smul.addr %s548, 8
        %s550 = scalar_lea.vmem %s3, %s549
      $region52: #{residual_block3d.2} parent=47 // pred_fallthru
        _
    $region48: #{residual_block3d.2} parent=5 // pred_fallthru
      _
  $region6: #{residual_block3d.2} parent=0 // loop_footer
    %s13 = sadd.s32 1, %s9
  $region7: #{residual_block3d.2} parent=0 // loop_footer_branch
    %8 = sbr.rel target = $region3
  $region8: #{residual_block3d.2} parent=0 // loop_exit
    _

// kernel: residual_block3d.3
$region0: #{residual_block3d.3}
  #allocation0 [shape = 'u32[]', space=smem, size = 0x4, offset = 0x4, fixed_abs, tag = 'smem constant byte address 0x4 - core index']
  #allocation1 [shape = 'u32[144,128]{1,0:T(1,128)}', space=vmem, size = 0x12000, scoped, tag = 'internal scratch']
  #allocation2 [shape = 'f32[8,128]{1,0:T(8,128)}', space=vmem, size = 0x1000, scoped, tag = 'scratch operand']
  %s0 = inlined_call_operand.vmem [shape: f32[2,10,10,144], index: 0, kind: input, shape index: {}]
  %s1 = inlined_call_operand.vmem [shape: f32[3,3,144,128], index: 1, kind: input, shape index: {}]
  %s2 = inlined_call_operand.vmem [shape: f32[1,128], index: 2, kind: input, shape index: {}]
  %s3 = inlined_call_operand.vmem [shape: f32[2,8,8,64], index: 3, kind: input, shape index: {}]
  %s4 = inlined_call_operand.vmem [shape: f32[64,128], index: 4, kind: input, shape index: {}]
  %s5 = inlined_call_operand.vmem [shape: f32[1,128], index: 5, kind: input, shape index: {}]
  %s6 = inlined_call_operand.vmem [shape: f32[2,8,8,128], index: 6, kind: output, shape index: {}]
  %s7 = sld [smem:[#allocation0]]
  $region65: #{residual_block3d.3} parent=0
    _
  %s9 = ssub.s32 1, %s7
  %s10 = scalar_select 0, %s9, %s7
  loop: start=0, step=1, limit=50
  $region2: #{residual_block3d.3} parent=0 // loop_pre_header
    _
  $region3: #{residual_block3d.3} parent=0 // loop_header
    %s12 = sphi 0, %s16
    %p13 = scmp.ge.s32.totalorder %s12, 50
    %s19 = sphi 0, %s38
    %s20 = sphi 0, %s34
    %s21 = sphi 0, %s30
    %s22 = sphi 0, %s19
    %s23 = sphi 0, %s20
    %s24 = sphi 0, %s21
    %s25 = sphi 0, %s22
    %s26 = sphi 0, %s23
    %s27 = sphi 0, %s24
    %s45 = sphi 0, %s47
    %s48 = sphi 0, %s45
    %s49 = sphi 0, %s48
    %s65 = sphi 0, %s49
    %s71 = sphi 0, %s73
    %s74 = sphi 0, %s71
    %s75 = sphi 0, %s74
    %s91 = sphi 0, %s75
    %s95 = sphi 0, %s95
    %s97 = sphi 0, %s95
    %s98 = sphi 0, %s97
    %s112 = sphi 0, %s98
    %s120 = sphi 0, %s122
    %s123 = sphi 0, %s120
    %s124 = sphi 0, %s123
    %s140 = sphi 0, %s124
    %s144 = sphi 0, %s144
    %s146 = sphi 0, %s144
    %s147 = sphi 0, %s146
    %s161 = sphi 0, %s147
    %s165 = sphi 0, %s165
    %s167 = sphi 0, %s165
    %s168 = sphi 0, %s167
    %s182 = sphi 0, %s168
    %s190 = sphi 0, %s192
    %s193 = sphi 0, %s190
    %s194 = sphi 0, %s193
    %s210 = sphi 0, %s194
  $region4: #{residual_block3d.3} parent=0 // loop_header_branch
    %15 = sbr.rel (%p13) target = $region8
  $region5: #{residual_block3d.3} parent=0 // loop_body
    %s17 = ssub.s32 %s12, 1
    %s18 = ssub.s32 %s12, 2
    %s28 = sadd.s32 1, %s21
    %p29 = scmp.ge.s32.totalorder %s28, 3
    %s30 = scalar_select %p29, 0, %s28
    %s31 = sadd.s32 1, %s20
    %s32 = scalar_select %p29, %s31, %s20
    %p33 = scmp.ge.s32.totalorder %s32, 8
    %s34 = scalar_select %p33, 0, %s32
    %s35 = sadd.s32 1, %s19
    %s36 = scalar_select %p33, %s35, %s19
    %p37 = scmp.ge.s32.totalorder %s36, 2
    %s38 = scalar_select %p37, 0, %s36
    %s39 = sadd.s32 %s20, %s21
    %s40 = sadd.s32 %s34, %s30
    %s41 = ssub.s32 %s19, %s38
    %s42 = ssub.s32 %s39, %s40
    %s43 = sor.u32 %s41, %s42
    %p44 = scmp.eq.s32.totalorder %s43, 0
    %s46 = sadd.s32 %s45, 1
    %s47 = scalar_select %p44, %s45, %s46
    %p50 = pneg %p44
    %p51 = scmp.eq.s32.totalorder %s12, 47
    %p52 = por %p50, %p51
    %p53 = scmp.ne.s32.totalorder %s45, %s48
    %p54 = scmp.eq.s32.totalorder %s12, 0
    %p55 = por %p53, %p54
    %p56 = scmp.ne.s32.totalorder %s45, %s48
    %p57 = scmp.eq.s32.totalorder %s17, 47
    %p58 = por %p56, %p57
    %p59 = scmp.ne.s32.totalorder %s48, %s49
    %p60 = scmp.eq.s32.totalorder %s17, 0
    %p61 = por %p59, %p60
    %p62 = scmp.ne.s32.totalorder %s48, %s49
    %p63 = scmp.eq.s32.totalorder %s18, 47
    %p64 = por %p62, %p63
    %p66 = scmp.ne.s32.totalorder %s49, %s65
    %p67 = scmp.eq.s32.totalorder %s18, 0
    %p68 = por %p66, %p67
    %s69 = ssub.s32 %s21, %s30
    %p70 = scmp.eq.s32.totalorder %s69, 0
    %s72 = sadd.s32 %s71, 1
    %s73 = scalar_select %p70, %s71, %s72
    %p76 = pneg %p70
    %p77 = scmp.eq.s32.totalorder %s12, 47
    %p78 = por %p76, %p77
    %p79 = scmp.ne.s32.totalorder %s71, %s74
    %p80 = scmp.eq.s32.totalorder %s12, 0
    %p81 = por %p79, %p80
    %p82 = scmp.ne.s32.totalorder %s71, %s74
    %p83 = scmp.eq.s32.totalorder %s17, 47
    %p84 = por %p82, %p83
    %p85 = scmp.ne.s32.totalorder %s74, %s75
    %p86 = scmp.eq.s32.totalorder %s17, 0
    %p87 = por %p85, %p86
    %p88 = scmp.ne.s32.totalorder %s74, %s75
    %p89 = scmp.eq.s32.totalorder %s18, 47
    %p90 = por %p88, %p89
    %p92 = scmp.ne.s32.totalorder %s75, %s91
    %p93 = scmp.eq.s32.totalorder %s18, 0
    %p94 = por %p92, %p93
    %s96 = sadd.s32 %s95, 1
    %p99 = scmp.eq.s32.totalorder %s12, 47
    %p100 = scmp.ne.s32.totalorder %s95, %s97
    %p101 = scmp.eq.s32.totalorder %s12, 0
    %p102 = por %p100, %p101
    %p103 = scmp.ne.s32.totalorder %s95, %s97
    %p104 = scmp.eq.s32.totalorder %s17, 47
    %p105 = por %p103, %p104
    %p106 = scmp.ne.s32.totalorder %s97, %s98
    %p107 = scmp.eq.s32.totalorder %s17, 0
    %p108 = por %p106, %p107
    %p109 = scmp.ne.s32.totalorder %s97, %s98
    %p110 = scmp.eq.s32.totalorder %s18, 47
    %p111 = por %p109, %p110
    %p113 = scmp.ne.s32.totalorder %s98, %s112
    %p114 = scmp.eq.s32.totalorder %s18, 0
    %p115 = por %p113, %p114
    %s116 = ssub.s32 %s19, %s38
    %s117 = ssub.s32 %s20, %s34
    %s118 = sor.u32 %s116, %s117
    %p119 = scmp.eq.s32.totalorder %s118, 0
    %s121 = sadd.s32 %s120, 1
    %s122 = scalar_select %p119, %s120, %s121
    %p125 = pneg %p119
    %p126 = scmp.eq.s32.totalorder %s12, 47
    %p127 = por %p125, %p126
    %p128 = scmp.ne.s32.totalorder %s120, %s123
    %p129 = scmp.eq.s32.totalorder %s12, 0
    %p130 = por %p128, %p129
    %p131 = scmp.ne.s32.totalorder %s120, %s123
    %p132 = scmp.eq.s32.totalorder %s17, 47
    %p133 = por %p131, %p132
    %p134 = scmp.ne.s32.totalorder %s123, %s124
    %p135 = scmp.eq.s32.totalorder %s17, 0
    %p136 = por %p134, %p135
    %p137 = scmp.ne.s32.totalorder %s123, %s124
    %p138 = scmp.eq.s32.totalorder %s18, 47
    %p139 = por %p137, %p138
    %p141 = scmp.ne.s32.totalorder %s124, %s140
    %p142 = scmp.eq.s32.totalorder %s18, 0
    %p143 = por %p141, %p142
    %s145 = sadd.s32 %s144, 1
    %p148 = scmp.eq.s32.totalorder %s12, 47
    %p149 = scmp.ne.s32.totalorder %s144, %s146
    %p150 = scmp.eq.s32.totalorder %s12, 0
    %p151 = por %p149, %p150
    %p152 = scmp.ne.s32.totalorder %s144, %s146
    %p153 = scmp.eq.s32.totalorder %s17, 47
    %p154 = por %p152, %p153
    %p155 = scmp.ne.s32.totalorder %s146, %s147
    %p156 = scmp.eq.s32.totalorder %s17, 0
    %p157 = por %p155, %p156
    %p158 = scmp.ne.s32.totalorder %s146, %s147
    %p159 = scmp.eq.s32.totalorder %s18, 47
    %p160 = por %p158, %p159
    %p162 = scmp.ne.s32.totalorder %s147, %s161
    %p163 = scmp.eq.s32.totalorder %s18, 0
    %p164 = por %p162, %p163
    %s166 = sadd.s32 %s165, 1
    %p169 = scmp.eq.s32.totalorder %s12, 47
    %p170 = scmp.ne.s32.totalorder %s165, %s167
    %p171 = scmp.eq.s32.totalorder %s12, 0
    %p172 = por %p170, %p171
    %p173 = scmp.ne.s32.totalorder %s165, %s167
    %p174 = scmp.eq.s32.totalorder %s17, 47
    %p175 = por %p173, %p174
    %p176 = scmp.ne.s32.totalorder %s167, %s168
    %p177 = scmp.eq.s32.totalorder %s17, 0
    %p178 = por %p176, %p177
    %p179 = scmp.ne.s32.totalorder %s167, %s168
    %p180 = scmp.eq.s32.totalorder %s18, 47
    %p181 = por %p179, %p180
    %p183 = scmp.ne.s32.totalorder %s168, %s182
    %p184 = scmp.eq.s32.totalorder %s18, 0
    %p185 = por %p183, %p184
    %s186 = ssub.s32 %s19, %s38
    %s187 = ssub.s32 %s20, %s34
    %s188 = sor.u32 %s186, %s187
    %p189 = scmp.eq.s32.totalorder %s188, 0
    %s191 = sadd.s32 %s190, 1
    %s192 = scalar_select %p189, %s190, %s191
    %p195 = pneg %p189
    %p196 = scmp.eq.s32.totalorder %s12, 47
    %p197 = por %p195, %p196
    %p198 = scmp.ne.s32.totalorder %s190, %s193
    %p199 = scmp.eq.s32.totalorder %s12, 0
    %p200 = por %p198, %p199
    %p201 = scmp.ne.s32.totalorder %s190, %s193
    %p202 = scmp.eq.s32.totalorder %s17, 47
    %p203 = por %p201, %p202
    %p204 = scmp.ne.s32.totalorder %s193, %s194
    %p205 = scmp.eq.s32.totalorder %s17, 0
    %p206 = por %p204, %p205
    %p207 = scmp.ne.s32.totalorder %s193, %s194
    %p208 = scmp.eq.s32.totalorder %s18, 47
    %p209 = por %p207, %p208
    %p211 = scmp.ne.s32.totalorder %s194, %s210
    %p212 = scmp.eq.s32.totalorder %s18, 0
    %p213 = por %p211, %p212
    %p214 = scmp.le.s32.totalorder 1, %s12
    %p215 = scmp.lt.s32.totalorder %s12, 49
    %p216 = pnand %p214, %p215
    %p217 = pneg %p216
    // Predicated region
    $region9: #{residual_block3d.3} parent=5 // pred_check
      _
    $region10: #{residual_block3d.3} parent=5 // pred_check_branch
      %219 = sbr.rel (%p216) target = $region12
    $region11: #{residual_block3d.3} parent=5 // pred_region
      %s220 = ssub.s32 %s12, 1
      // Predicated region
      $region13: #{residual_block3d.3} parent=11 // pred_check
        %p221 = pneg %p108
      $region14: #{residual_block3d.3} parent=11 // pred_check_branch
        %223 = sbr.rel (%p221) target = $region16
      $region15: #{residual_block3d.3} parent=11 // pred_region
        _
      $region16: #{residual_block3d.3} parent=11 // pred_fallthru
        _
      // Predicated region
      $region17: #{residual_block3d.3} parent=11 // pred_check
        %p224 = pneg %p157
      $region18: #{residual_block3d.3} parent=11 // pred_check_branch
        %226 = sbr.rel (%p224) target = $region20
      $region19: #{residual_block3d.3} parent=11 // pred_region
        _
      $region20: #{residual_block3d.3} parent=11 // pred_fallthru
        _
      // Predicated region
      $region21: #{residual_block3d.3} parent=11 // pred_check
        %p227 = pneg %p178
      $region22: #{residual_block3d.3} parent=11 // pred_check_branch
        %229 = sbr.rel (%p227) target = $region24
      $region23: #{residual_block3d.3} parent=11 // pred_region
        _
      $region24: #{residual_block3d.3} parent=11 // pred_fallthru
        _
    $region12: #{residual_block3d.3} parent=5 // pred_fallthru
      _
    %p230 = scmp.lt.s32.totalorder %s12, 48
    // Predicated region
    $region25: #{residual_block3d.3} parent=5 // pred_check
      %p231 = pneg %p230
    $region26: #{residual_block3d.3} parent=5 // pred_check_branch
      %233 = sbr.rel (%p231) target = $region28
    $region27: #{residual_block3d.3} parent=5 // pred_region
      // Predicated region
      $region29: #{residual_block3d.3} parent=27 // pred_check
        %p234 = pneg %p55
      $region30: #{residual_block3d.3} parent=27 // pred_check_branch
        %236 = sbr.rel (%p234) target = $region32
      $region31: #{residual_block3d.3} parent=27 // pred_region
        %s237 = sadd.s32 %s20, %s21
        %p238 = scmp.lt.s32.totalorder %s19, 1
        %s239 = scalar_select %p238, %s19, 1
        %p240 = scmp.lt.s32.totalorder %s237, 9
        %s241 = scalar_select %p240, %s237, 9
        %s242 = smul.addr %s241, 4
        %s243 = smul.addr %s239, 40
        %s244 = sadd.s32 %s242, %s243
        %s245 = smul.addr %s244, 8
        %s246 = scalar_lea.vmem %s0, %s245
        %s247 = sadd.s32 %s20, %s21
      $region32: #{residual_block3d.3} parent=27 // pred_fallthru
        _
      // Predicated region
      $region33: #{residual_block3d.3} parent=27 // pred_check
        %p248 = pneg %p81
      $region34: #{residual_block3d.3} parent=27 // pred_check_branch
        %250 = sbr.rel (%p248) target = $region36
      $region35: #{residual_block3d.3} parent=27 // pred_region
        %p251 = scmp.lt.s32.totalorder %s21, 2
        %s252 = scalar_select %p251, %s21, 2
        %s253 = smul.addr %s252, 54
        %s254 = smul.addr %s253, 8
        %s255 = scalar_lea.vmem %s1, %s254
      $region36: #{residual_block3d.3} parent=27 // pred_fallthru
        _
      // Predicated region
      $region37: #{residual_block3d.3} parent=27 // pred_check
        %p256 = pneg %p130
      $region38: #{residual_block3d.3} parent=27 // pred_check_branch
        %258 = sbr.rel (%p256) target = $region40
      $region39: #{residual_block3d.3} parent=27 // pred_region
        %p259 = scmp.lt.s32.totalorder %s19, 1
        %s260 = scalar_select %p259, %s19, 1
        %p261 = scmp.lt.s32.totalorder %s20, 7
        %s262 = scalar_select %p261, %s20, 7
        %s263 = smul.addr %s260, 8
        %s264 = sadd.s32 %s262, %s263
        %s265 = smul.addr %s264, 8
        %s266 = scalar_lea.vmem %s3, %s265
      $region40: #{residual_block3d.3} parent=27 // pred_fallthru
        _
    $region28: #{residual_block3d.3} parent=5 // pred_fallthru
      _
    %p267 = scmp.le.s32.totalorder 1, %s12
    %p268 = scmp.lt.s32.totalorder %s12, 49
    %p269 = pnand %p267, %p268
    %p270 = pneg %p269
    // Predicated region
    $region41: #{residual_block3d.3} parent=5 // pred_check
      _
    $region42: #{residual_block3d.3} parent=5 // pred_check_branch
      %272 = sbr.rel (%p269) target = $region44
    $region43: #{residual_block3d.3} parent=5 // pred_region
      %s273 = ssub.s32 %s12, 1
      %s274 = sadd.s32 %s23, %s24
      %p275 = scmp.lt.s32.totalorder %s22, 1
      %s276 = scalar_select %p275, %s22, 1
      %p277 = scmp.lt.s32.totalorder %s274, 9
      %s278 = scalar_select %p277, %s274, 9
      %s279 = smul.addr %s278, 4
      %s280 = smul.addr %s276, 40
      %s281 = sadd.s32 %s279, %s280
      %s282 = smul.addr %s281, 8
      %s283 = scalar_lea.vmem %s0, %s282
      %p284 = pneg %p61
      %p285 = pneg %p58
      %p286 = scmp.lt.s32.totalorder %s24, 2
      %s287 = scalar_select %p286, %s24, 2
      %s288 = smul.addr %s287, 54
      %s289 = smul.addr %s288, 8
      %s290 = scalar_lea.vmem %s1, %s289
      %p291 = pneg %p87
      %p292 = pneg %p84
      %p293 = pneg %p108
      %p294 = pneg %p105
      %p295 = scmp.lt.s32.totalorder %s22, 1
      %s296 = scalar_select %p295, %s22, 1
      %p297 = scmp.lt.s32.totalorder %s23, 7
      %s298 = scalar_select %p297, %s23, 7
      %s299 = smul.addr %s296, 8
      %s300 = sadd.s32 %s298, %s299
      %s301 = smul.addr %s300, 8
      %s302 = scalar_lea.vmem %s3, %s301
      %p303 = pneg %p136
      %p304 = pneg %p133
      %p305 = pneg %p157
      %p306 = pneg %p154
      %p307 = pneg %p178
      %p308 = pneg %p175
      %p309 = pneg %p206
      %p310 = pneg %p203
      %p311 = scmp.lt.s32.totalorder %s22, 1
      %s312 = scalar_select %p311, %s22, 1
      %p313 = scmp.lt.s32.totalorder %s23, 7
      %s314 = scalar_select %p313, %s23, 7
      %s315 = smul.addr %s312, 8
      %s316 = sadd.s32 %s314, %s315
      %s317 = smul.addr %s316, 8
      %s318 = scalar_lea.vmem %s6, %s317
      %s319 = sadd.s32 %s23, %s24
      %p320 = scmp.lt.s32.totalorder %s22, 1
      %s321 = scalar_select %p320, %s22, 1
      %p322 = scmp.lt.s32.totalorder %s319, 9
      %s323 = scalar_select %p322, %s319, 9
      %s324 = smul.addr %s323, 4
      %s325 = smul.addr %s321, 40
      %s326 = sadd.s32 %s324, %s325
      %s327 = smul.addr %s326, 8
      %s328 = scalar_lea.vmem %s0, %s327
      %s329 = sadd.s32 %s23, %s24
      %p330 = scmp.lt.s32.totalorder %s24, 2
      %s331 = scalar_select %p330, %s24, 2
      %s332 = smul.addr %s331, 54
      %s333 = smul.addr %s332, 8
      %s334 = scalar_lea.vmem %s1, %s333
      %p335 = scmp.lt.s32.totalorder %s22, 1
      %s336 = scalar_select %p335, %s22, 1
      %p337 = scmp.lt.s32.totalorder %s23, 7
      %s338 = scalar_select %p337, %s23, 7
      %s339 = smul.addr %s336, 8
      %s340 = sadd.s32 %s338, %s339
      %s341 = smul.addr %s340, 8
      %s342 = scalar_lea.vmem %s3, %s341
      %p343 = scmp.lt.s32.totalorder %s22, 1
      %s344 = scalar_select %p343, %s22, 1
      %p345 = scmp.lt.s32.totalorder %s23, 7
      %s346 = scalar_select %p345, %s23, 7
      %s347 = smul.addr %s344, 8
      %s348 = sadd.s32 %s346, %s347
      %s349 = smul.addr %s348, 8
      %s350 = scalar_lea.vmem %s6, %s349
      %p351 = scmp.eq.s32.totalorder %s24, 0
      // Predicated region
      $region45: #{residual_block3d.3} parent=43 // pred_check
        %p352 = pneg %p351
      $region46: #{residual_block3d.3} parent=43 // pred_check_branch
        %354 = sbr.rel (%p352) target = $region48
      $region47: #{residual_block3d.3} parent=43 // pred_region
        %355 = vst [vmem:[#allocation2] sm:$0xff] 0.0
      $region48: #{residual_block3d.3} parent=43 // pred_fallthru
        _
      %v356 = vld [vmem:[%s328] sm:$0xff]
      %v357 = vld [vmem:[%s328 + $0x8] sm:$0xff]
      %v358 = vld [vmem:[%s328 + $0x10] sm:$0x3]
      %v359 = vld [vmem:[%s328 + $0x18] sm:$0x3]
      %v360 = vld [vmem:[#allocation2] sm:$0xff]
      %v361 = vld [vmem:[%s334] sm:$0xff]
      %v362 = vld [vmem:[%s334 + $0x8] sm:$0xff]
      %v363 = vld [vmem:[%s334 + $0x10] sm:$0xff]
      %v364 = vld [vmem:[%s334 + $0x18] sm:$0xff]
      %v365 = vld [vmem:[%s334 + $0x20] sm:$0xff]
      %v366 = vld [vmem:[%s334 + $0x28] sm:$0xff]
      %v367 = vld [vmem:[%s334 + $0x30] sm:$0xff]
      %v368 = vld [vmem:[%s334 + $0x38] sm:$0xff]
      %v369 = vld [vmem:[%s334 + $0x40] sm:$0xff]
      %v370 = vld [vmem:[%s334 + $0x48] sm:$0xff]
      %v371 = vld [vmem:[%s334 + $0x50] sm:$0xff]
      %v372 = vld [vmem:[%s334 + $0x58] sm:$0xff]
      %v373 = vld [vmem:[%s334 + $0x60] sm:$0xff]
      %v374 = vld [vmem:[%s334 + $0x68] sm:$0xff]
      %v375 = vld [vmem:[%s334 + $0x70] sm:$0xff]
      %v376 = vld [vmem:[%s334 + $0x78] sm:$0xff]
      %v377 = vld [vmem:[%s334 + $0x80] sm:$0xff]
      %v378 = vld [vmem:[%s334 + $0x88] sm:$0xff]
      %vm379 = vcmask 130048
      %v381 = vsel %vm379, %v357, 0
      %383 = vmatprep.subr.mxu0 0.0
      %384 = vmatpush1.msra.mxu0 %v376
      %385 = vmatprep.subr.mxu0 0.0
      %386 = vmatpush1.msra.mxu0 %v375
      %387 = vmatprep.subr.mxu0 0.0
      %388 = vmatpush1.msra.mxu0 %v374
      %389 = vmatprep.subr.mxu0 0.0
      %390 = vmatpush1.msra.mxu0 %v373
      %391 = vmatprep.subr.mxu0 0.0
      %392 = vmatpush1.msra.mxu0 %v372
      %393 = vmatprep.subr.mxu0 0.0
      %394 = vmatpush1.msra.mxu0 %v371
      %395 = vmatprep.subr.mxu0 0.0
      %396 = vmatpush1.msra.mxu0 %v370
      %397 = vmatprep.subr.mxu0 0.0
      %398 = vmatpush1.msra.mxu0 %v369
      %399 = vmatprep.subr.mxu0 0.0
      %400 = vmatpush1.msra.mxu0 %v368
      %401 = vmatprep.subr.mxu0 0.0
      %402 = vmatpush1.msra.mxu0 %v367
      %403 = vmatprep.subr.mxu0 0.0
      %404 = vmatpush1.msra.mxu0 %v366
      %405 = vmatprep.subr.mxu0 0.0
      %406 = vmatpush1.msra.mxu0 %v365
      %407 = vmatprep.subr.mxu0 0.0
      %408 = vmatpush1.msra.mxu0 %v364
      %409 = vmatprep.subr.mxu0 0.0
      %410 = vmatpush1.msra.mxu0 %v363
      %411 = vmatprep.subr.mxu0 0.0
      %412 = vmatpush1.msra.mxu0 %v362
      %413 = vmatprep.subr.mxu0 0.0
      %414 = vmatpush1.msra.mxu0 %v361
      %415 = vmatprep.subr.mxu0 0.0
      %416 = vmatpush2.msra.mxu0 0.0
      %417 = vmatprep.subr.mxu0 0.0
      %418 = vmatpush2.msra.mxu0 0.0
      %419 = vmatprep.subr.mxu0 0.0
      %420 = vmatpush2.msra.mxu0 0.0
      %421 = vmatprep.subr.mxu0 0.0
      %422 = vmatpush2.msra.mxu0 0.0
      %423 = vmatprep.subr.mxu0 0.0
      %424 = vmatpush2.msra.mxu0 0.0
      %425 = vmatprep.subr.mxu0 0.0
      %426 = vmatpush2.msra.mxu0 0.0
      %427 = vmatprep.subr.mxu0 0.0
      %428 = vmatpush2.msra.mxu0 0.0
      %429 = vmatprep.subr.mxu0 0.0
      %430 = vmatpush2.msra.mxu0 0.0
      %431 = vmatprep.subr.mxu0 0.0
      %432 = vmatpush2.msra.mxu0 0.0
      %433 = vmatprep.subr.mxu0 0.0
      %434 = vmatpush2.msra.mxu0 0.0
      %435 = vmatprep.subr.mxu0 0.0
      %436 = vmatpush2.msra.mxu0 0.0
      %437 = vmatprep.subr.mxu0 0.0
      %438 = vmatpush2.msra.mxu0 0.0
      %439 = vmatprep.subr.mxu0 0.0
      %440 = vmatpush2.msra.mxu0 0.0
      %441 = vmatprep.subr.mxu0 0.0
      %442 = vmatpush2.msra.mxu0 0.0
      %443 = vmatprep.subr.mxu0 0.0
      %444 = vmatpush2.msra.mxu0 %v378
      %445 = vmatprep.subr.mxu0 0.0
      %446 = vmatpush2.msra.mxu0 %v377
      %447 = vmatprep.mubr.f32.mxu0 %v381
      %448 = vmatmul.mubr.f32.gmra.mxu0 %v356
      %v449 = vpop.f32.mrf.mxu0
      %v450 = vadd.f32 0.0, %v449
      %v451 = vpop.f32.mrf.mxu0
      %452 = vdwg.mxu0
      %v453 = vadd.f32 %v360, %v450
      %s454 = scalar_lea.vmem %s334, 144
      %v455 = vld [vmem:[%s454] sm:$0xff]
      %v456 = vld [vmem:[%s454 + $0x8] sm:$0xff]
      %v457 = vld [vmem:[%s454 + $0x10] sm:$0xff]
      %v458 = vld [vmem:[%s454 + $0x18] sm:$0xff]
      %v459 = vld [vmem:[%s454 + $0x20] sm:$0xff]
      %v460 = vld [vmem:[%s454 + $0x28] sm:$0xff]
      %v461 = vld [vmem:[%s454 + $0x30] sm:$0xff]
      %v462 = vld [vmem:[%s454 + $0x38] sm:$0xff]
      %v463 = vld [vmem:[%s454 + $0x40] sm:$0xff]
      %v464 = vld [vmem:[%s454 + $0x48] sm:$0xff]
      %v465 = vld [vmem:[%s454 + $0x50] sm:$0xff]
      %v466 = vld [vmem:[%s454 + $0x58] sm:$0xff]
      %v467 = vld [vmem:[%s454 + $0x60] sm:$0xff]
      %v468 = vld [vmem:[%s454 + $0x68] sm:$0xff]
      %v469 = vld [vmem:[%s454 + $0x70] sm:$0xff]
      %v470 = vld [vmem:[%s454 + $0x78] sm:$0xff]
      %v471 = vld [vmem:[%s454 + $0x80] sm:$0xff]
      %v472 = vld [vmem:[%s454 + $0x88] sm:$0xff]
      %vm476 = vcmask 1046528
      %v477 = vrot.slane %v356, 1
      %v478 = vrot.slane %v358, 1
      %v479 = vsel %vm476, %v477, %v478
      %v480 = vrot.slane %v357, 1
      %v481 = vrot.slane %v359, 1
      %v482 = vsel %vm476, %v480, %v481
      %v484 = vsel %vm379, %v482, 0
      %486 = vmatprep.subr.mxu0 0.0
      %487 = vmatpush1.msra.mxu0 %v470
      %488 = vmatprep.subr.mxu0 0.0
      %489 = vmatpush1.msra.mxu0 %v469
      %490 = vmatprep.subr.mxu0 0.0
      %491 = vmatpush1.msra.mxu0 %v468
      %492 = vmatprep.subr.mxu0 0.0
      %493 = vmatpush1.msra.mxu0 %v467
      %494 = vmatprep.subr.mxu0 0.0
      %495 = vmatpush1.msra.mxu0 %v466
      %496 = vmatprep.subr.mxu0 0.0
      %497 = vmatpush1.msra.mxu0 %v465
      %498 = vmatprep.subr.mxu0 0.0
      %499 = vmatpush1.msra.mxu0 %v464
      %500 = vmatprep.subr.mxu0 0.0
      %501 = vmatpush1.msra.mxu0 %v463
      %502 = vmatprep.subr.mxu0 0.0
      %503 = vmatpush1.msra.mxu0 %v462
      %504 = vmatprep.subr.mxu0 0.0
      %505 = vmatpush1.msra.mxu0 %v461
      %506 = vmatprep.subr.mxu0 0.0
      %507 = vmatpush1.msra.mxu0 %v460
      %508 = vmatprep.subr.mxu0 0.0
      %509 = vmatpush1.msra.mxu0 %v459
      %510 = vmatprep.subr.mxu0 0.0
      %511 = vmatpush1.msra.mxu0 %v458
      %512 = vmatprep.subr.mxu0 0.0
      %513 = vmatpush1.msra.mxu0 %v457
      %514 = vmatprep.subr.mxu0 0.0
      %515 = vmatpush1.msra.mxu0 %v456
      %516 = vmatprep.subr.mxu0 0.0
      %517 = vmatpush1.msra.mxu0 %v455
      %518 = vmatprep.subr.mxu0 0.0
      %519 = vmatpush2.msra.mxu0 0.0
      %520 = vmatprep.subr.mxu0 0.0
      %521 = vmatpush2.msra.mxu0 0.0
      %522 = vmatprep.subr.mxu0 0.0
      %523 = vmatpush2.msra.mxu0 0.0
      %524 = vmatprep.subr.mxu0 0.0
      %525 = vmatpush2.msra.mxu0 0.0
      %526 = vmatprep.subr.mxu0 0.0
      %527 = vmatpush2.msra.mxu0 0.0
      %528 = vmatprep.subr.mxu0 0.0
      %529 = vmatpush2.msra.mxu0 0.0
      %530 = vmatprep.subr.mxu0 0.0
      %531 = vmatpush2.msra.mxu0 0.0
      %532 = vmatprep.subr.mxu0 0.0
      %533 = vmatpush2.msra.mxu0 0.0
      %534 = vmatprep.subr.mxu0 0.0
      %535 = vmatpush2.msra.mxu0 0.0
      %536 = vmatprep.subr.mxu0 0.0
      %537 = vmatpush2.msra.mxu0 0.0
      %538 = vmatprep.subr.mxu0 0.0
      %539 = vmatpush2.msra.mxu0 0.0
      %540 = vmatprep.subr.mxu0 0.0
      %541 = vmatpush2.msra.mxu0 0.0
      %542 = vmatprep.subr.mxu0 0.0
      %543 = vmatpush2.msra.mxu0 0.0
      %544 = vmatprep.subr.mxu0 0.0
      %545 = vmatpush2.msra.mxu0 0.0
      %546 = vmatprep.subr.mxu0 0.0
      %547 = vmatpush2.msra.mxu0 %v472
      %548 = vmatprep.subr.mxu0 0.0
      %549 = vmatpush2.msra.mxu0 %v471
      %550 = vmatprep.mubr.f32.mxu0 %v484
      %551 = vmatmul.mubr.f32.gmra.mxu0 %v479
      %v552 = vpop.f32.mrf.mxu0
      %v553 = vadd.f32 0.0, %v552
      %v554 = vpop.f32.mrf.mxu0
      %555 = vdwg.mxu0
      %v556 = vadd.f32 %v453, %v553
      %s557 = scalar_lea.vmem %s334, 288
      %v558 = vld [vmem:[%s557] sm:$0xff]
      %v559 = vld [vmem:[%s557 + $0x8] sm:$0xff]
      %v560 = vld [vmem:[%s557 + $0x10] sm:$0xff]
      %v561 = vld [vmem:[%s557 + $0x18] sm:$0xff]
      %v562 = vld [vmem:[%s557 + $0x20] sm:$0xff]
      %v563 = vld [vmem:[%s557 + $0x28] sm:$0xff]
      %v564 = vld [vmem:[%s557 + $0x30] sm:$0xff]
      %v565 = vld [vmem:[%s557 + $0x38] sm:$0xff]
      %v566 = vld [vmem:[%s557 + $0x40] sm:$0xff]
      %v567 = vld [vmem:[%s557 + $0x48] sm:$0xff]
      %v568 = vld [vmem:[%s557 + $0x50] sm:$0xff]
      %v569 = vld [vmem:[%s557 + $0x58] sm:$0xff]
      %v570 = vld [vmem:[%s557 + $0x60] sm:$0xff]
      %v571 = vld [vmem:[%s557 + $0x68] sm:$0xff]
      %v572 = vld [vmem:[%s557 + $0x70] sm:$0xff]
      %v573 = vld [vmem:[%s557 + $0x78] sm:$0xff]
      %v574 = vld [vmem:[%s557 + $0x80] sm:$0xff]
      %v575 = vld [vmem:[%s557 + $0x88] sm:$0xff]
      %vm576 = vcmask 1045504
      %v577 = vrot.slane %v356, 2
      %v578 = vrot.slane %v358, 2
      %v579 = vsel %vm576, %v577, %v578
      %v580 = vrot.slane %v357, 2
      %v581 = vrot.slane %v359, 2
      %v582 = vsel %vm576, %v580, %v581
      %v584 = vsel %vm379, %v582, 0
      %586 = vmatprep.subr.mxu0 0.0
      %587 = vmatpush1.msra.mxu0 %v573
      %588 = vmatprep.subr.mxu0 0.0
      %589 = vmatpush1.msra.mxu0 %v572
      %590 = vmatprep.subr.mxu0 0.0
      %591 = vmatpush1.msra.mxu0 %v571
      %592 = vmatprep.subr.mxu0 0.0
      %593 = vmatpush1.msra.mxu0 %v570
      %594 = vmatprep.subr.mxu0 0.0
      %595 = vmatpush1.msra.mxu0 %v569
      %596 = vmatprep.subr.mxu0 0.0
      %597 = vmatpush1.msra.mxu0 %v568
      %598 = vmatprep.subr.mxu0 0.0
      %599 = vmatpush1.msra.mxu0 %v567
      %600 = vmatprep.subr.mxu0 0.0
      %601 = vmatpush1.msra.mxu0 %v566
      %602 = vmatprep.subr.mxu0 0.0
      %603 = vmatpush1.msra.mxu0 %v565
      %604 = vmatprep.subr.mxu0 0.0
      %605 = vmatpush1.msra.mxu0 %v564
      %606 = vmatprep.subr.mxu0 0.0
      %607 = vmatpush1.msra.mxu0 %v563
      %608 = vmatprep.subr.mxu0 0.0
      %609 = vmatpush1.msra.mxu0 %v562
      %610 = vmatprep.subr.mxu0 0.0
      %611 = vmatpush1.msra.mxu0 %v561
      %612 = vmatprep.subr.mxu0 0.0
      %613 = vmatpush1.msra.mxu0 %v560
      %614 = vmatprep.subr.mxu0 0.0
      %615 = vmatpush1.msra.mxu0 %v559
      %616 = vmatprep.subr.mxu0 0.0
      %617 = vmatpush1.msra.mxu0 %v558
      %618 = vmatprep.subr.mxu0 0.0
      %619 = vmatpush2.msra.mxu0 0.0
      %620 = vmatprep.subr.mxu0 0.0
      %621 = vmatpush2.msra.mxu0 0.0
      %622 = vmatprep.subr.mxu0 0.0
      %623 = vmatpush2.msra.mxu0 0.0
      %624 = vmatprep.subr.mxu0 0.0
      %625 = vmatpush2.msra.mxu0 0.0
      %626 = vmatprep.subr.mxu0 0.0
      %627 = vmatpush2.msra.mxu0 0.0
      %628 = vmatprep.subr.mxu0 0.0
      %629 = vmatpush2.msra.mxu0 0.0
      %630 = vmatprep.subr.mxu0 0.0
      %631 = vmatpush2.msra.mxu0 0.0
      %632 = vmatprep.subr.mxu0 0.0
      %633 = vmatpush2.msra.mxu0 0.0
      %634 = vmatprep.subr.mxu0 0.0
      %635 = vmatpush2.msra.mxu0 0.0
      %636 = vmatprep.subr.mxu0 0.0
      %637 = vmatpush2.msra.mxu0 0.0
      %638 = vmatprep.subr.mxu0 0.0
      %639 = vmatpush2.msra.mxu0 0.0
      %640 = vmatprep.subr.mxu0 0.0
      %641 = vmatpush2.msra.mxu0 0.0
      %642 = vmatprep.subr.mxu0 0.0
      %643 = vmatpush2.msra.mxu0 0.0
      %644 = vmatprep.subr.mxu0 0.0
      %645 = vmatpush2.msra.mxu0 0.0
      %646 = vmatprep.subr.mxu0 0.0
      %647 = vmatpush2.msra.mxu0 %v575
      %648 = vmatprep.subr.mxu0 0.0
      %649 = vmatpush2.msra.mxu0 %v574
      %650 = vmatprep.mubr.f32.mxu0 %v584
      %651 = vmatmul.mubr.f32.gmra.mxu0 %v579
      %v652 = vpop.f32.mrf.mxu0
      %v653 = vadd.f32 0.0, %v652
      %v654 = vpop.f32.mrf.mxu0
      %655 = vdwg.mxu0
      %v656 = vadd.f32 %v556, %v653
      %657 = vst [vmem:[#allocation2] sm:$0xff] %v656
      %p658 = scmp.eq.s32.totalorder %s24, 2
      // Predicated region
      $region49: #{residual_block3d.3} parent=43 // pred_check
        %p659 = pneg %p658
      $region50: #{residual_block3d.3} parent=43 // pred_check_branch
        %661 = sbr.rel (%p659) target = $region52
      $region51: #{residual_block3d.3} parent=43 // pred_region
        %v662 = vld [vmem:[#allocation2] sm:$0xff]
        %v663 = vld [vmem:[%s2] sm:$0x1]
        %v665 = vlaneseq
        %v666 = vshrl.u32 %v665, 7
        %v667 = vsub.s32 0, %v666
        %v668 = vrot.slane %v663, %v667
        %v670 = vadd.f32 %v662, %v668
        %vm671 = vcmp.ge.f32.partialorder %v670, 0.0
        %v672 = vmul.f32 %v670, 0.01
        %v673 = vsel %vm671, %v670, %v672
        %v674 = vld [vmem:[%s342] sm:$0xff]
        %v675 = vld [vmem:[%s4] sm:$0xff]
        %v676 = vld [vmem:[%s4 + $0x8] sm:$0xff]
        %v677 = vld [vmem:[%s4 + $0x10] sm:$0xff]
        %v678 = vld [vmem:[%s4 + $0x18] sm:$0xff]
        %v679 = vld [vmem:[%s4 + $0x20] sm:$0xff]
        %v680 = vld [vmem:[%s4 + $0x28] sm:$0xff]
        %v681 = vld [vmem:[%s4 + $0x30] sm:$0xff]
        %v682 = vld [vmem:[%s4 + $0x38] sm:$0xff]
        %vm683 = vcmask 523264
        %v685 = vsel %vm683, %v674, 0
        %687 = vmatprep.subr.mxu0 0.0
        %688 = vmatpush1.msra.mxu0 0.0
        %689 = vmatprep.subr.mxu0 0.0
        %690 = vmatpush1.msra.mxu0 0.0
        %691 = vmatprep.subr.mxu0 0.0
        %692 = vmatpush1.msra.mxu0 0.0
        %693 = vmatprep.subr.mxu0 0.0
        %694 = vmatpush1.msra.mxu0 0.0
        %695 = vmatprep.subr.mxu0 0.0
        %696 = vmatpush1.msra.mxu0 0.0
        %697 = vmatprep.subr.mxu0 0.0
        %698 = vmatpush1.msra.mxu0 0.0
        %699 = vmatprep.subr.mxu0 0.0
        %700 = vmatpush1.msra.mxu0 0.0
        %701 = vmatprep.subr.mxu0 0.0
        %702 = vmatpush1.msra.mxu0 0.0
        %703 = vmatprep.subr.mxu0 0.0
        %704 = vmatpush1.msra.mxu0 %v682
        %705 = vmatprep.subr.mxu0 0.0
        %706 = vmatpush1.msra.mxu0 %v681
        %707 = vmatprep.subr.mxu0 0.0
        %708 = vmatpush1.msra.mxu0 %v680
        %709 = vmatprep.subr.mxu0 0.0
        %710 = vmatpush1.msra.mxu0 %v679
        %711 = vmatprep.subr.mxu0 0.0
        %712 = vmatpush1.msra.mxu0 %v678
        %713 = vmatprep.subr.mxu0 0.0
        %714 = vmatpush1.msra.mxu0 %v677
        %715 = vmatprep.subr.mxu0 0.0
        %716 = vmatpush1.msra.mxu0 %v676
        %717 = vmatprep.subr.mxu0 0.0
        %718 = vmatpush1.msra.mxu0 %v675
        %719 = vmatprep.subr.mxu0 0.0
        %720 = vmatpush2.msra.mxu0 0.0
        %721 = vmatprep.subr.mxu0 0.0
        %722 = vmatpush2.msra.mxu0 0.0
        %723 = vmatprep.subr.mxu0 0.0
        %724 = vmatpush2.msra.mxu0 0.0
        %725 = vmatprep.subr.mxu0 0.0
        %726 = vmatpush2.msra.mxu0 0.0
        %727 = vmatprep.subr.mxu0 0.0
        %728 = vmatpush2.msra.mxu0 0.0
        %729 = vmatprep.subr.mxu0 0.0
        %730 = vmatpush2.msra.mxu0 0.0
        %731 = vmatprep.subr.mxu0 0.0
        %732 = vmatpush2.msra.mxu0 0.0
        %733 = vmatprep.subr.mxu0 0.0
        %734 = vmatpush2.msra.mxu0 0.0
        %735 = vmatprep.subr.mxu0 0.0
        %736 = vmatpush2.msra.mxu0 0.0
        %737 = vmatprep.subr.mxu0 0.0
        %738 = vmatpush2.msra.mxu0 0.0
        %739 = vmatprep.subr.mxu0 0.0
        %740 = vmatpush2.msra.mxu0 0.0
        %741 = vmatprep.subr.mxu0 0.0
        %742 = vmatpush2.msra.mxu0 0.0
        %743 = vmatprep.subr.mxu0 0.0
        %744 = vmatpush2.msra.mxu0 0.0
        %745 = vmatprep.subr.mxu0 0.0
        %746 = vmatpush2.msra.mxu0 0.0
        %747 = vmatprep.subr.mxu0 0.0
        %748 = vmatpush2.msra.mxu0 0.0
        %749 = vmatprep.subr.mxu0 0.0
        %750 = vmatpush2.msra.mxu0 0.0
        %751 = vmatprep.mubr.f32.mxu0 0.0
        %752 = vmatmul.mubr.f32.gmra.mxu0 %v685
        %v753 = vpop.f32.mrf.mxu0
        %v754 = vadd.f32 0.0, %v753
        %v755 = vpop.f32.mrf.mxu0
        %756 = vdwg.mxu0
        %v757 = vadd.f32 %v673, %v754
        %v758 = vld [vmem:[%s5] sm:$0x1]
        %v760 = vlaneseq
        %v761 = vshrl.u32 %v760, 7
        %v762 = vsub.s32 0, %v761
        %v763 = vrot.slane %v758, %v762
        %v765 = vadd.f32 %v757, %v763
        %766 = vst [vmem:[%s350] sm:$0xff] %v765
      $region52: #{residual_block3d.3} parent=43 // pred_fallthru
        _
      %p767 = scmp.lt.s32.totalorder %s22, 1
      %s768 = scalar_select %p767, %s22, 1
      %p769 = scmp.lt.s32.totalorder %s23, 7
      %s770 = scalar_select %p769, %s23, 7
      %s771 = smul.addr %s768, 8
      %s772 = sadd.s32 %s770, %s771
      %s773 = smul.addr %s772, 8
      %s774 = scalar_lea.vmem %s6, %s773
      // Predicated region
      $region53: #{residual_block3d.3} parent=43 // pred_check
        %p775 = pneg %p203
      $region54: #{residual_block3d.3} parent=43 // pred_check_branch
        %777 = sbr.rel (%p775) target = $region56
      $region55: #{residual_block3d.3} parent=43 // pred_region
        _
      $region56: #{residual_block3d.3} parent=43 // pred_fallthru
        _
    $region44: #{residual_block3d.3} parent=5 // pred_fallthru
      _
    %p778 = scmp.le.s32.totalorder 2, %s12
    // Predicated region
    $region57: #{residual_block3d.3} parent=5 // pred_check
      %p779 = pneg %p778
    $region58: #{residual_block3d.3} parent=5 // pred_check_branch
      %781 = sbr.rel (%p779) target = $region60
    $region59: #{residual_block3d.3} parent=5 // pred_region
      %s782 = ssub.s32 %s12, 2
      // Predicated region
      $region61: #{residual_block3d.3} parent=59 // pred_check
        %p783 = pneg %p209
      $region62: #{residual_block3d.3} parent=59 // pred_check_branch
        %785 = sbr.rel (%p783) target = $region64
      $region63: #{residual_block3d.3} parent=59 // pred_region
        %p786 = scmp.lt.s32.totalorder %s25, 1
        %s787 = scalar_select %p786, %s25, 1
        %p788 = scmp.lt.s32.totalorder %s26, 7
        %s789 = scalar_select %p788, %s26, 7
        %s790 = smul.addr %s787, 8
        %s791 = sadd.s32 %s789, %s790
        %s792 = smul.addr %s791, 8
        %s793 = scalar_lea.vmem %s6, %s792
      $region64: #{residual_block3d.3} parent=59 // pred_fallthru
        _
    $region60: #{residual_block3d.3} parent=5 // pred_fallthru
      _
  $region6: #{residual_block3d.3} parent=0 // loop_footer
    %s16 = sadd.s32 1, %s12
  $region7: #{residual_block3d.3} parent=0 // loop_footer_branch
    %11 = sbr.rel target = $region3
  $region8: #{residual_block3d.3} parent=0 // loop_exit
    _

</llo_original>
